<compile_context>
chip_gen: v5e
topology: v5e:2x2
jax: 0.10.0
libtpu: 0.0.40
codegen_flags: <defaults>
</compile_context>

<pallas_src>
import functools

import jax
import jax.numpy as jnp
from jax import lax
from jax.experimental import pallas as pl
from jax.experimental.pallas import tpu as pltpu


EPS = 1e-5
MXU_DTYPE = jnp.float32          # set to jnp.bfloat16 on v6e/v7x (relax test tol)
INTERMEDIATE_DTYPE = jnp.float32  # set to jnp.bfloat16 on v5e to halve y1/y2 HBM traffic
_VMEM_LIMIT = 64 * 1024 * 1024
_VMEM_BUDGET = 24 * 1024 * 1024   # per-step working-set target used for band selection


# ----------------------------- kernels -------------------------------------


def _conv_core(w_ref, y_ref, stat_ref, pad_ref, band, Wp, Cin, Cout):
    """Shared conv body: zero-padded halo buffer in VMEM -> im2col value -> one matmul.

    pad_ref:  (band+2, Wp+2, Cin) f32, fully written by the caller for this step
    w_ref:    (9*Cin, Cout) flattened HWIO weights
    y_ref:    (1, band, Wp, Cout) pre-BN conv output block
    stat_ref: (1, 2, Cout) per-(batch, band) [sum, centered M2] over band pixels
    """
    # Build the im2col slab as a value (no scratch store/reload; single concat),
    # then one K = 9*Cin matmul on the MXU with f32 accumulation.
    taps = []
    for dy in range(3):
        for dx in range(3):
            taps.append(
                pad_ref[dy:dy + band, dx:dx + Wp, :].reshape(band * Wp, Cin))
    col = jnp.concatenate(taps, axis=1)                       # (band*Wp, 9*Cin)

    acc = jnp.dot(col.astype(MXU_DTYPE), w_ref[...].astype(MXU_DTYPE),
                  preferred_element_type=jnp.float32)         # (band*Wp, Cout)

    y_ref[0] = acc.reshape(band, Wp, Cout).astype(y_ref.dtype)

    # Per-band sum + centered M2 (numerically stable; combined with Chan's
    # formula on the host).  Direct slice stores, no concatenate.
    count = band * Wp
    s = jnp.sum(acc, axis=0, keepdims=True)                   # (1, Cout)
    mu = s * (1.0 / count)
    m2 = jnp.sum((acc - mu) ** 2, axis=0, keepdims=True)      # (1, Cout)
    stat_ref[0:1, 0:1, :] = s.reshape(1, 1, Cout)
    stat_ref[0:1, 1:2, :] = m2.reshape(1, 1, Cout)


def _pool2x2(x):
    """(rows, 2, Wp, 2, Cin) raw block -> (rows, Wp, Cin) 2x2 max-pooled."""
    m01 = jnp.maximum(x[:, 0, :, 0, :], x[:, 0, :, 1, :])
    m23 = jnp.maximum(x[:, 1, :, 0, :], x[:, 1, :, 1, :])
    return jnp.maximum(m01, m23)


def _fill_pad(pad_ref, main, top, bot, band, Wp, Cin):
    """Write the zero-padded halo buffer for this band (fully rewritten per step)."""
    r = pl.program_id(1)
    last = pl.num_programs(1) - 1
    zcol = jnp.zeros((band + 2, 1, Cin), jnp.float32)
    pad_ref[:, 0:1, :] = zcol                       # left image border
    pad_ref[:, Wp + 1:Wp + 2, :] = zcol             # right image border
    pad_ref[1:band + 1, 1:Wp + 1, :] = main
    # Top/bottom rows: real halo row from the neighbouring band, or the image
    # zero-padding at the outer boundaries.
    pad_ref[0:1, 1:Wp + 1, :] = jnp.where(r > 0, top, 0.0)
    pad_ref[band + 1:band + 2, 1:Wp + 1, :] = jnp.where(r < last, bot, 0.0)


def _pool_conv_kernel(xm_ref, xt_ref, xb_ref, w_ref, y_ref, stat_ref, pad_ref,
                      *, band, Wp, Cin, Cout):
    # xm_ref: (1, band, 2, Wp, 2, Cin) raw rows of this band (pre-pool)
    # xt_ref/xb_ref: (1, 1, 2, Wp, 2, Cin) raw rows of the halo pooled rows.
    # 2x2 max pool fused into the load (no standalone pool pass / HBM trip).
    main = _pool2x2(xm_ref[0]).astype(jnp.float32)   # (band, Wp, Cin)
    top = _pool2x2(xt_ref[0]).astype(jnp.float32)    # (1, Wp, Cin)
    bot = _pool2x2(xb_ref[0]).astype(jnp.float32)
    _fill_pad(pad_ref, main, top, bot, band, Wp, Cin)
    _conv_core(w_ref, y_ref, stat_ref, pad_ref, band, Wp, Cin, Cout)


def _bnrelu_conv_kernel(ym_ref, yt_ref, yb_ref, scale_ref, shift_ref, w_ref,
                        o_ref, stat_ref, pad_ref, *, band, Wp, Cin, Cout):
    # ym_ref: (1, band, Wp, Cin) pre-BN output of conv1; halos (1, 1, Wp, Cin).
    # BN1 (precomputed per-channel scale/shift) + ReLU fused into the load.
    def bnrelu(v):
        return jnp.maximum(
            v.astype(jnp.float32) * scale_ref[...] + shift_ref[...], 0.0)

    main = bnrelu(ym_ref[0])
    top = bnrelu(yt_ref[0])
    bot = bnrelu(yb_ref[0])
    _fill_pad(pad_ref, main, top, bot, band, Wp, Cin)
    _conv_core(w_ref, o_ref, stat_ref, pad_ref, band, Wp, Cin, Cout)


def _bnrelu_apply_kernel(y_ref, scale_ref, shift_ref, o_ref):
    # y_ref block: (TM, L); scale/shift: (1, L); lane-dense when L == 128.
    y = y_ref[...].astype(jnp.float32)
    o_ref[...] = jnp.maximum(
        y * scale_ref[...] + shift_ref[...], 0.0).astype(o_ref.dtype)


# ----------------------------- band selection -------------------------------


def _band_bytes(band, Wp, Cin, Cout, pooled_input, itemsize=4):
    """Rough per-step VMEM working set for a `band`-row conv step."""
    in_row = (2 * Wp * 2 * Cin) if pooled_input else (Wp * Cin)
    elems = (2 * band * in_row            # double-buffered main input block
             + 2 * 2 * in_row             # double-buffered halo blocks
             + 2 * band * Wp * Cout       # double-buffered output block
             + (band + 2) * (Wp + 2) * Cin  # pad scratch
             + band * Wp * 9 * Cin        # im2col value
             + band * Wp * Cout           # f32 accumulator
             + 2 * 9 * Cin * Cout         # weights
             + 2 * 2 * Cout)              # stats block
    return elems * itemsize


def _pick_band(Hp, Wp, Cin, Cout, pooled_input):
    """Largest divisor of Hp that fits the VMEM budget; prefer >= 2 bands so the
    parallel grid has enough slices to keep both v7x TensorCores busy."""
    fits = [d for d in range(1, Hp + 1)
            if Hp % d == 0 and _band_bytes(d, Wp, Cin, Cout, pooled_input) <= _VMEM_BUDGET]
    if not fits:
        return 1  # TODO(synk): add width banding if even 1-row bands overflow VMEM
    multi = [d for d in fits if Hp // d >= 2]
    return max(multi) if multi else max(fits)


# ----------------------------- wrappers ------------------------------------


_CONV_PARAMS = pltpu.CompilerParams(
    dimension_semantics=("parallel", "parallel"),
    vmem_limit_bytes=_VMEM_LIMIT)


def pool_conv(x_nhwc, w_flat, Hp, Wp, band):
    """Fused 2x2 maxpool + 3x3 'same' conv (no bias) + per-band channel stats."""
    N, H, W, Cin = x_nhwc.shape
    Cout = w_flat.shape[-1]
    R = Hp // band
    x6 = x_nhwc.reshape(N, Hp, 2, Wp, 2, Cin)   # free metadata reshape in HBM
    kernel = functools.partial(_pool_conv_kernel, band=band, Wp=Wp, Cin=Cin, Cout=Cout)
    main_spec = pl.BlockSpec((1, band, 2, Wp, 2, Cin),
                             lambda b, r: (b, r, 0, 0, 0, 0))
    top_spec = pl.BlockSpec((1, 1, 2, Wp, 2, Cin),
                            lambda b, r: (b, jnp.maximum(r * band - 1, 0), 0, 0, 0, 0))
    bot_spec = pl.BlockSpec((1, 1, 2, Wp, 2, Cin),
                            lambda b, r: (b, jnp.minimum(r * band + band, Hp - 1), 0, 0, 0, 0))
    return pl.pallas_call(
        kernel,
        out_shape=(jax.ShapeDtypeStruct((N, Hp, Wp, Cout), INTERMEDIATE_DTYPE),
                   jax.ShapeDtypeStruct((N * R, 2, Cout), jnp.float32)),
        grid_spec=pltpu.PrefetchScalarGridSpec(
            num_scalar_prefetch=0,
            grid=(N, R),
            in_specs=[
                main_spec, top_spec, bot_spec,
                pl.BlockSpec((9 * Cin, Cout), lambda b, r: (0, 0)),
            ],
            out_specs=[
                pl.BlockSpec((1, band, Wp, Cout), lambda b, r: (b, r, 0, 0)),
                pl.BlockSpec((1, 2, Cout), lambda b, r: (b * R + r, 0, 0)),
            ],
            scratch_shapes=[pltpu.VMEM((band + 2, Wp + 2, Cin), jnp.float32)],
        ),
        compiler_params=_CONV_PARAMS,
    )(x6, x6, x6, w_flat)


def bnrelu_conv(y_nhwc, scale, shift, w_flat, band):
    """Fused BN(scale/shift)+ReLU on the input + 3x3 'same' conv + channel stats."""
    N, Hp, Wp, Cin = y_nhwc.shape
    Cout = w_flat.shape[-1]
    R = Hp // band
    kernel = functools.partial(_bnrelu_conv_kernel, band=band, Wp=Wp, Cin=Cin, Cout=Cout)
    main_spec = pl.BlockSpec((1, band, Wp, Cin), lambda b, r: (b, r, 0, 0))
    top_spec = pl.BlockSpec((1, 1, Wp, Cin),
                            lambda b, r: (b, jnp.maximum(r * band - 1, 0), 0, 0))
    bot_spec = pl.BlockSpec((1, 1, Wp, Cin),
                            lambda b, r: (b, jnp.minimum(r * band + band, Hp - 1), 0, 0))
    return pl.pallas_call(
        kernel,
        out_shape=(jax.ShapeDtypeStruct((N, Hp, Wp, Cout), INTERMEDIATE_DTYPE),
                   jax.ShapeDtypeStruct((N * R, 2, Cout), jnp.float32)),
        grid_spec=pltpu.PrefetchScalarGridSpec(
            num_scalar_prefetch=0,
            grid=(N, R),
            in_specs=[
                main_spec, top_spec, bot_spec,
                pl.BlockSpec((1, Cin), lambda b, r: (0, 0)),
                pl.BlockSpec((1, Cin), lambda b, r: (0, 0)),
                pl.BlockSpec((9 * Cin, Cout), lambda b, r: (0, 0)),
            ],
            out_specs=[
                pl.BlockSpec((1, band, Wp, Cout), lambda b, r: (b, r, 0, 0)),
                pl.BlockSpec((1, 2, Cout), lambda b, r: (b * R + r, 0, 0)),
            ],
            scratch_shapes=[pltpu.VMEM((band + 2, Wp + 2, Cin), jnp.float32)],
        ),
        compiler_params=_CONV_PARAMS,
    )(y_nhwc, y_nhwc, y_nhwc, scale, shift, w_flat)


def batchnorm_relu_apply(y_nhwc, scale, shift, out_dtype):
    """Final tiled BN+ReLU apply. Packs channels with spatial so loads/stores are
    lane-dense (last dim 128) whenever C divides 128; fixed 1024-row tiles."""
    N, H, W, C = y_nhwc.shape
    total = N * H * W * C
    if total % 128 == 0 and 128 % C == 0:
        lanes = 128
        rep = 128 // C
        y2 = y_nhwc.reshape(total // 128, 128)             # free metadata reshape
        s2 = jnp.tile(scale.reshape(-1), rep).reshape(1, 128)
        b2 = jnp.tile(shift.reshape(-1), rep).reshape(1, 128)
    else:
        lanes = C
        y2 = y_nhwc.reshape(N * H * W, C)
        s2 = scale.reshape(1, C)
        b2 = shift.reshape(1, C)
    rows = y2.shape[0]
    tm = rows if rows <= 1024 else 1024        # 1024x128xf32 = 512 KiB per block
    out = pl.pallas_call(
        _bnrelu_apply_kernel,
        out_shape=jax.ShapeDtypeStruct((rows, lanes), out_dtype),
        grid_spec=pltpu.PrefetchScalarGridSpec(
            num_scalar_prefetch=0,
            grid=(pl.cdiv(rows, tm),),
            in_specs=[
                pl.BlockSpec((tm, lanes), lambda i: (i, 0)),
                pl.BlockSpec((1, lanes), lambda i: (0, 0)),
                pl.BlockSpec((1, lanes), lambda i: (0, 0)),
            ],
            out_specs=pl.BlockSpec((tm, lanes), lambda i: (i, 0)),
        ),
        compiler_params=pltpu.CompilerParams(dimension_semantics=("parallel",)),
    )(y2, s2, b2)
    return out.reshape(N, H, W, C)


def _bn_scale_shift(stats, gamma, beta, band_count, eps=EPS):
    """Fold per-band [sum, centered M2] stats into BN scale/shift (Chan combine)."""
    S = stats[:, 0, :]                       # (G, C) per-band sums
    M2 = stats[:, 1, :]                      # (G, C) per-band centered M2
    total = stats.shape[0] * band_count
    mean = jnp.sum(S, axis=0) / total
    mu_g = S / band_count
    m2_total = jnp.sum(M2, axis=0) + band_count * jnp.sum((mu_g - mean) ** 2, axis=0)
    var = jnp.maximum(m2_total / total, 0.0)  # biased variance, PyTorch training mode
    scale = gamma * lax.rsqrt(var + eps)
    shift = beta - mean * scale
    return scale.reshape(1, -1), shift.reshape(1, -1)


def down_block(x_nchw, params):
    """DownBlock forward. Input/output NCHW (PyTorch convention)."""
    x = jnp.transpose(x_nchw, (0, 2, 3, 1))              # NCHW -> NHWC
    N, H, W, Cin = x.shape
    assert H % 2 == 0 and W % 2 == 0, "MaxPool2d(2) path assumes even H, W"
    Hp, Wp = H // 2, W // 2

    p1, p2 = params["conv1"], params["conv2"]
    C1 = p1["w"].shape[-1]
    C2 = p2["w"].shape[-1]
    # Flatten HWIO weights to (9*Cin, Cout) matching the im2col tap ordering.
    w1 = p1["w"].reshape(9 * Cin, C1).astype(MXU_DTYPE)
    w2 = p2["w"].reshape(9 * C1, C2).astype(MXU_DTYPE)
    # Conv biases intentionally not applied (training-mode BN cancels them exactly).

    band1 = _pick_band(Hp, Wp, Cin, C1, pooled_input=True)
    band2 = _pick_band(Hp, Wp, C1, C2, pooled_input=False)

    y1, s1 = pool_conv(x, w1, Hp, Wp, band1)              # pool + conv1 + stats
    scale1, shift1 = _bn_scale_shift(s1, p1["gamma"], p1["beta"], band1 * Wp)
    y2, s2 = bnrelu_conv(y1, scale1, shift1, w2, band2)   # BN1+ReLU + conv2 + stats
    scale2, shift2 = _bn_scale_shift(s2, p2["gamma"], p2["beta"], band2 * Wp)
    out = batchnorm_relu_apply(y2, scale2, shift2, x.dtype)  # BN2 + ReLU
    return jnp.transpose(out, (0, 3, 1, 2))               # NHWC -> NCHW


# ----------------------------- reference -----------------------------------


def down_block_ref(x_nchw, params):
    x = jnp.transpose(x_nchw, (0, 2, 3, 1))
    x = lax.reduce_window(x, -jnp.inf, lax.max,
                          (1, 2, 2, 1), (1, 2, 2, 1), "VALID")
    for layer in ("conv1", "conv2"):
        p = params[layer]
        x = lax.conv_general_dilated(
            x, p["w"], window_strides=(1, 1), padding=((1, 1), (1, 1)),
            dimension_numbers=("NHWC", "HWIO", "NHWC")) + p["b"]
        mean = jnp.mean(x, axis=(0, 1, 2))
        var = jnp.mean((x - mean) ** 2, axis=(0, 1, 2))
        x = jnp.maximum(
            (x - mean) * lax.rsqrt(var + EPS) * p["gamma"] + p["beta"], 0.0)
    return jnp.transpose(x, (0, 3, 1, 2))


# ----------------------------- main ----------------------------------------


def make_params(key, in_ch, out_ch):
    k1, k2, k3, k4 = jax.random.split(key, 4)
    return {
        "conv1": {
            "w": jax.random.normal(k1, (3, 3, in_ch, out_ch), jnp.float32) * 0.1,
            "b": jax.random.normal(k2, (out_ch,), jnp.float32) * 0.1,
            "gamma": jnp.ones((out_ch,), jnp.float32),   # PyTorch BN defaults
            "beta": jnp.zeros((out_ch,), jnp.float32),
        },
        "conv2": {
            "w": jax.random.normal(k3, (3, 3, out_ch, out_ch), jnp.float32) * 0.1,
            "b": jax.random.normal(k4, (out_ch,), jnp.float32) * 0.1,
            "gamma": jnp.ones((out_ch,), jnp.float32),
            "beta": jnp.zeros((out_ch,), jnp.float32),
        },
    }


if __name__ == "__main__":
    key = jax.random.PRNGKey(0)
    kx, kp = jax.random.split(key)

    N, in_ch, out_ch, S = 2, 4, 8, 16
    x = jax.random.normal(kx, (N, in_ch, S, S), jnp.float32)   # NCHW like torch
    params = make_params(kp, in_ch, out_ch)

    out = jax.block_until_ready(down_block(x, params))

    ref = down_block_ref(x, params)
    assert out.shape == (N, out_ch, S // 2, S // 2), out.shape
    assert jnp.allclose(out, ref, atol=1e-4, rtol=1e-4), \
        float(jnp.max(jnp.abs(out - ref)))

    print("KERNEL_OK")
</pallas_src>

<mosaic_0001>
module attributes {stable_mosaic.version = 11 : i64} {
  func.func @_pool_conv_kernel(%arg0: i32, %arg1: i32, %arg2: memref<1x4x2x8x2x4xf32, #tpu.memory_space<vmem>>, %arg3: memref<1x1x2x8x2x4xf32, #tpu.memory_space<vmem>>, %arg4: memref<1x1x2x8x2x4xf32, #tpu.memory_space<vmem>>, %arg5: memref<36x8xf32, #tpu.memory_space<vmem>>, %arg6: memref<1x4x8x8xf32, #tpu.memory_space<vmem>>, %arg7: memref<1x2x8xf32, #tpu.memory_space<vmem>>, %arg8: memref<6x10x4xf32, #tpu.memory_space<vmem>>) attributes {dimension_semantics = [#tpu.dimension_semantics<parallel>, #tpu.dimension_semantics<parallel>], iteration_bounds = array<i64: 2, 2>, scalar_prefetch = 0 : i64, scratch_operands = 1 : i64, tpu.core_type = #tpu.core_type<tc>, window_params = [{transform_indices = @transform_0, window_bounds = array<i64: 1, 4, 2, 8, 2, 4>}, {transform_indices = @transform_1, window_bounds = array<i64: 1, 1, 2, 8, 2, 4>}, {transform_indices = @transform_2, window_bounds = array<i64: 1, 1, 2, 8, 2, 4>}, {pipeline_mode = #tpu.pipeline_mode<synchronous>, transform_indices = @transform_3, window_bounds = array<i64: 36, 8>}, {transform_indices = @transform_4, window_bounds = array<i64: 1, 4, 8, 8>}, {transform_indices = @transform_5, window_bounds = array<i64: 1, 2, 8>}]} {
    %c0 = arith.constant 0 : index
    %c0_0 = arith.constant 0 : index
    %c0_1 = arith.constant 0 : index
    %c0_2 = arith.constant 0 : index
    %c0_3 = arith.constant 0 : index
    %c0_4 = arith.constant 0 : index
    %0 = vector.load %arg2[%c0, %c0_0, %c0_1, %c0_2, %c0_3, %c0_4] : memref<1x4x2x8x2x4xf32, #tpu.memory_space<vmem>>, vector<1x4x2x8x2x4xf32>
    %1 = vector.shape_cast %0 : vector<1x4x2x8x2x4xf32> to vector<4x2x8x2x4xf32>
    %2 = vector.extract_strided_slice %1 {offsets = [0, 0, 0, 0, 0], sizes = [4, 1, 8, 1, 4], strides = [1, 1, 1, 1, 1]} : vector<4x2x8x2x4xf32> to vector<4x1x8x1x4xf32>
    %3 = vector.shape_cast %2 : vector<4x1x8x1x4xf32> to vector<4x8x4xf32>
    %4 = vector.extract_strided_slice %1 {offsets = [0, 0, 0, 1, 0], sizes = [4, 1, 8, 1, 4], strides = [1, 1, 1, 1, 1]} : vector<4x2x8x2x4xf32> to vector<4x1x8x1x4xf32>
    %5 = vector.shape_cast %4 : vector<4x1x8x1x4xf32> to vector<4x8x4xf32>
    %6 = arith.maximumf %3, %5 : vector<4x8x4xf32>
    %7 = vector.extract_strided_slice %1 {offsets = [0, 1, 0, 0, 0], sizes = [4, 1, 8, 1, 4], strides = [1, 1, 1, 1, 1]} : vector<4x2x8x2x4xf32> to vector<4x1x8x1x4xf32>
    %8 = vector.shape_cast %7 : vector<4x1x8x1x4xf32> to vector<4x8x4xf32>
    %9 = vector.extract_strided_slice %1 {offsets = [0, 1, 0, 1, 0], sizes = [4, 1, 8, 1, 4], strides = [1, 1, 1, 1, 1]} : vector<4x2x8x2x4xf32> to vector<4x1x8x1x4xf32>
    %10 = vector.shape_cast %9 : vector<4x1x8x1x4xf32> to vector<4x8x4xf32>
    %11 = arith.maximumf %8, %10 : vector<4x8x4xf32>
    %12 = arith.maximumf %6, %11 : vector<4x8x4xf32>
    %c0_5 = arith.constant 0 : index
    %c0_6 = arith.constant 0 : index
    %c0_7 = arith.constant 0 : index
    %c0_8 = arith.constant 0 : index
    %c0_9 = arith.constant 0 : index
    %c0_10 = arith.constant 0 : index
    %13 = vector.load %arg3[%c0_5, %c0_6, %c0_7, %c0_8, %c0_9, %c0_10] : memref<1x1x2x8x2x4xf32, #tpu.memory_space<vmem>>, vector<1x1x2x8x2x4xf32>
    %14 = vector.shape_cast %13 : vector<1x1x2x8x2x4xf32> to vector<1x2x8x2x4xf32>
    %15 = vector.extract_strided_slice %14 {offsets = [0, 0, 0, 0, 0], sizes = [1, 1, 8, 1, 4], strides = [1, 1, 1, 1, 1]} : vector<1x2x8x2x4xf32> to vector<1x1x8x1x4xf32>
    %16 = vector.shape_cast %15 : vector<1x1x8x1x4xf32> to vector<1x8x4xf32>
    %17 = vector.extract_strided_slice %14 {offsets = [0, 0, 0, 1, 0], sizes = [1, 1, 8, 1, 4], strides = [1, 1, 1, 1, 1]} : vector<1x2x8x2x4xf32> to vector<1x1x8x1x4xf32>
    %18 = vector.shape_cast %17 : vector<1x1x8x1x4xf32> to vector<1x8x4xf32>
    %19 = arith.maximumf %16, %18 : vector<1x8x4xf32>
    %20 = vector.extract_strided_slice %14 {offsets = [0, 1, 0, 0, 0], sizes = [1, 1, 8, 1, 4], strides = [1, 1, 1, 1, 1]} : vector<1x2x8x2x4xf32> to vector<1x1x8x1x4xf32>
    %21 = vector.shape_cast %20 : vector<1x1x8x1x4xf32> to vector<1x8x4xf32>
    %22 = vector.extract_strided_slice %14 {offsets = [0, 1, 0, 1, 0], sizes = [1, 1, 8, 1, 4], strides = [1, 1, 1, 1, 1]} : vector<1x2x8x2x4xf32> to vector<1x1x8x1x4xf32>
    %23 = vector.shape_cast %22 : vector<1x1x8x1x4xf32> to vector<1x8x4xf32>
    %24 = arith.maximumf %21, %23 : vector<1x8x4xf32>
    %25 = arith.maximumf %19, %24 : vector<1x8x4xf32>
    %c0_11 = arith.constant 0 : index
    %c0_12 = arith.constant 0 : index
    %c0_13 = arith.constant 0 : index
    %c0_14 = arith.constant 0 : index
    %c0_15 = arith.constant 0 : index
    %c0_16 = arith.constant 0 : index
    %26 = vector.load %arg4[%c0_11, %c0_12, %c0_13, %c0_14, %c0_15, %c0_16] : memref<1x1x2x8x2x4xf32, #tpu.memory_space<vmem>>, vector<1x1x2x8x2x4xf32>
    %27 = vector.shape_cast %26 : vector<1x1x2x8x2x4xf32> to vector<1x2x8x2x4xf32>
    %28 = vector.extract_strided_slice %27 {offsets = [0, 0, 0, 0, 0], sizes = [1, 1, 8, 1, 4], strides = [1, 1, 1, 1, 1]} : vector<1x2x8x2x4xf32> to vector<1x1x8x1x4xf32>
    %29 = vector.shape_cast %28 : vector<1x1x8x1x4xf32> to vector<1x8x4xf32>
    %30 = vector.extract_strided_slice %27 {offsets = [0, 0, 0, 1, 0], sizes = [1, 1, 8, 1, 4], strides = [1, 1, 1, 1, 1]} : vector<1x2x8x2x4xf32> to vector<1x1x8x1x4xf32>
    %31 = vector.shape_cast %30 : vector<1x1x8x1x4xf32> to vector<1x8x4xf32>
    %32 = arith.maximumf %29, %31 : vector<1x8x4xf32>
    %33 = vector.extract_strided_slice %27 {offsets = [0, 1, 0, 0, 0], sizes = [1, 1, 8, 1, 4], strides = [1, 1, 1, 1, 1]} : vector<1x2x8x2x4xf32> to vector<1x1x8x1x4xf32>
    %34 = vector.shape_cast %33 : vector<1x1x8x1x4xf32> to vector<1x8x4xf32>
    %35 = vector.extract_strided_slice %27 {offsets = [0, 1, 0, 1, 0], sizes = [1, 1, 8, 1, 4], strides = [1, 1, 1, 1, 1]} : vector<1x2x8x2x4xf32> to vector<1x1x8x1x4xf32>
    %36 = vector.shape_cast %35 : vector<1x1x8x1x4xf32> to vector<1x8x4xf32>
    %37 = arith.maximumf %34, %36 : vector<1x8x4xf32>
    %38 = arith.maximumf %32, %37 : vector<1x8x4xf32>
    %cst = arith.constant 0.000000e+00 : f32
    %39 = vector.broadcast %cst : f32 to vector<6x1x4xf32>
    %c0_17 = arith.constant 0 : index
    %c0_18 = arith.constant 0 : index
    %c0_19 = arith.constant 0 : index
    %40 = vector.load %arg8[%c0_17, %c0_18, %c0_19] : memref<6x10x4xf32, #tpu.memory_space<vmem>>, vector<6x1x4xf32>
    tpu.vector_store %arg8[%c0_17, %c0_18, %c0_19], %39 {strides = array<i32>} : memref<6x10x4xf32, #tpu.memory_space<vmem>>, vector<6x1x4xf32>,
    %c0_20 = arith.constant 0 : index
    %c9 = arith.constant 9 : index
    %c0_21 = arith.constant 0 : index
    %41 = vector.load %arg8[%c0_20, %c9, %c0_21] : memref<6x10x4xf32, #tpu.memory_space<vmem>>, vector<6x1x4xf32>
    tpu.vector_store %arg8[%c0_20, %c9, %c0_21], %39 {strides = array<i32>} : memref<6x10x4xf32, #tpu.memory_space<vmem>>, vector<6x1x4xf32>,
    %c1 = arith.constant 1 : index
    %c1_22 = arith.constant 1 : index
    %c0_23 = arith.constant 0 : index
    %42 = vector.load %arg8[%c1, %c1_22, %c0_23] : memref<6x10x4xf32, #tpu.memory_space<vmem>>, vector<4x8x4xf32>
    tpu.vector_store %arg8[%c1, %c1_22, %c0_23], %12 {strides = array<i32>} : memref<6x10x4xf32, #tpu.memory_space<vmem>>, vector<4x8x4xf32>,
    %c0_i32 = arith.constant 0 : i32
    %43 = arith.cmpi sgt, %arg1, %c0_i32 : i32
    %cst_24 = arith.constant 0.000000e+00 : f32
    %44 = vector.broadcast %cst_24 : f32 to vector<1x8x4xf32>
    %45 = arith.select %43, %25, %44 : vector<1x8x4xf32>
    %c0_25 = arith.constant 0 : index
    %c1_26 = arith.constant 1 : index
    %c0_27 = arith.constant 0 : index
    %46 = vector.load %arg8[%c0_25, %c1_26, %c0_27] : memref<6x10x4xf32, #tpu.memory_space<vmem>>, vector<1x8x4xf32>
    tpu.vector_store %arg8[%c0_25, %c1_26, %c0_27], %45 {strides = array<i32>} : memref<6x10x4xf32, #tpu.memory_space<vmem>>, vector<1x8x4xf32>,
    %c1_i32 = arith.constant 1 : i32
    %47 = arith.cmpi slt, %arg1, %c1_i32 : i32
    %cst_28 = arith.constant 0.000000e+00 : f32
    %48 = vector.broadcast %cst_28 : f32 to vector<1x8x4xf32>
    %49 = arith.select %47, %38, %48 : vector<1x8x4xf32>
    %c5 = arith.constant 5 : index
    %c1_29 = arith.constant 1 : index
    %c0_30 = arith.constant 0 : index
    %50 = vector.load %arg8[%c5, %c1_29, %c0_30] : memref<6x10x4xf32, #tpu.memory_space<vmem>>, vector<1x8x4xf32>
    tpu.vector_store %arg8[%c5, %c1_29, %c0_30], %49 {strides = array<i32>} : memref<6x10x4xf32, #tpu.memory_space<vmem>>, vector<1x8x4xf32>,
    %c0_31 = arith.constant 0 : index
    %c0_32 = arith.constant 0 : index
    %c0_33 = arith.constant 0 : index
    %51 = vector.load %arg8[%c0_31, %c0_32, %c0_33] : memref<6x10x4xf32, #tpu.memory_space<vmem>>, vector<4x8x4xf32>
    %52 = vector.shape_cast %51 : vector<4x8x4xf32> to vector<32x4xf32>
    %c0_34 = arith.constant 0 : index
    %c1_35 = arith.constant 1 : index
    %c0_36 = arith.constant 0 : index
    %53 = vector.load %arg8[%c0_34, %c1_35, %c0_36] : memref<6x10x4xf32, #tpu.memory_space<vmem>>, vector<4x8x4xf32>
    %54 = vector.shape_cast %53 : vector<4x8x4xf32> to vector<32x4xf32>
    %c0_37 = arith.constant 0 : index
    %c2 = arith.constant 2 : index
    %c0_38 = arith.constant 0 : index
    %55 = vector.load %arg8[%c0_37, %c2, %c0_38] : memref<6x10x4xf32, #tpu.memory_space<vmem>>, vector<4x8x4xf32>
    %56 = vector.shape_cast %55 : vector<4x8x4xf32> to vector<32x4xf32>
    %c1_39 = arith.constant 1 : index
    %c0_40 = arith.constant 0 : index
    %c0_41 = arith.constant 0 : index
    %57 = vector.load %arg8[%c1_39, %c0_40, %c0_41] : memref<6x10x4xf32, #tpu.memory_space<vmem>>, vector<4x8x4xf32>
    %58 = vector.shape_cast %57 : vector<4x8x4xf32> to vector<32x4xf32>
    %c1_42 = arith.constant 1 : index
    %c1_43 = arith.constant 1 : index
    %c0_44 = arith.constant 0 : index
    %59 = vector.load %arg8[%c1_42, %c1_43, %c0_44] : memref<6x10x4xf32, #tpu.memory_space<vmem>>, vector<4x8x4xf32>
    %60 = vector.shape_cast %59 : vector<4x8x4xf32> to vector<32x4xf32>
    %c1_45 = arith.constant 1 : index
    %c2_46 = arith.constant 2 : index
    %c0_47 = arith.constant 0 : index
    %61 = vector.load %arg8[%c1_45, %c2_46, %c0_47] : memref<6x10x4xf32, #tpu.memory_space<vmem>>, vector<4x8x4xf32>
    %62 = vector.shape_cast %61 : vector<4x8x4xf32> to vector<32x4xf32>
    %c2_48 = arith.constant 2 : index
    %c0_49 = arith.constant 0 : index
    %c0_50 = arith.constant 0 : index
    %63 = vector.load %arg8[%c2_48, %c0_49, %c0_50] : memref<6x10x4xf32, #tpu.memory_space<vmem>>, vector<4x8x4xf32>
    %64 = vector.shape_cast %63 : vector<4x8x4xf32> to vector<32x4xf32>
    %c2_51 = arith.constant 2 : index
    %c1_52 = arith.constant 1 : index
    %c0_53 = arith.constant 0 : index
    %65 = vector.load %arg8[%c2_51, %c1_52, %c0_53] : memref<6x10x4xf32, #tpu.memory_space<vmem>>, vector<4x8x4xf32>
    %66 = vector.shape_cast %65 : vector<4x8x4xf32> to vector<32x4xf32>
    %c2_54 = arith.constant 2 : index
    %c2_55 = arith.constant 2 : index
    %c0_56 = arith.constant 0 : index
    %67 = vector.load %arg8[%c2_54, %c2_55, %c0_56] : memref<6x10x4xf32, #tpu.memory_space<vmem>>, vector<4x8x4xf32>
    %68 = vector.shape_cast %67 : vector<4x8x4xf32> to vector<32x4xf32>
    %69 = tpu.concatenate %52, %54, %56, %58, %60, %62, %64, %66, %68 in 1 : vector<32x4xf32>, vector<32x4xf32>, vector<32x4xf32>, vector<32x4xf32>, vector<32x4xf32>, vector<32x4xf32>, vector<32x4xf32>, vector<32x4xf32>, vector<32x4xf32> -> vector<32x36xf32>
    %c0_57 = arith.constant 0 : index
    %c0_58 = arith.constant 0 : index
    %70 = vector.load %arg5[%c0_57, %c0_58] : memref<36x8xf32, #tpu.memory_space<vmem>>, vector<36x8xf32>
    %cst_59 = arith.constant dense<0.000000e+00> : vector<32x8xf32>
    %71 = tpu.matmul %69, %70, %cst_59 {dimension_numbers = #tpu.dot_dimension_numbers<[1], [0], [0], [1], [0, 0, 1, 1], [], []>} : vector<32x36xf32>, vector<36x8xf32>, vector<32x8xf32> -> vector<32x8xf32>
    %72 = vector.shape_cast %71 : vector<32x8xf32> to vector<4x8x8xf32>
    %c0_60 = arith.constant 0 : index
    %c0_61 = arith.constant 0 : index
    %c0_62 = arith.constant 0 : index
    %c0_63 = arith.constant 0 : index
    %73 = vector.load %arg6[%c0_60, %c0_61, %c0_62, %c0_63] : memref<1x4x8x8xf32, #tpu.memory_space<vmem>>, vector<1x4x8x8xf32>
    %74 = vector.shape_cast %73 : vector<1x4x8x8xf32> to vector<4x8x8xf32>
    %75 = vector.shape_cast %72 : vector<4x8x8xf32> to vector<1x4x8x8xf32>
    tpu.vector_store %arg6[%c0_60, %c0_61, %c0_62, %c0_63], %75 {strides = array<i32>} : memref<1x4x8x8xf32, #tpu.memory_space<vmem>>, vector<1x4x8x8xf32>,
    %cst_64 = arith.constant dense<0.000000e+00> : vector<8xf32>
    %76 = vector.multi_reduction <add>, %71, %cst_64 [0] : vector<32x8xf32> to vector<8xf32>
    %77 = vector.shape_cast %76 : vector<8xf32> to vector<1x8xf32>
    %cst_65 = arith.constant 3.125000e-02 : f32
    %78 = vector.broadcast %cst_65 : f32 to vector<1x8xf32>
    %79 = arith.mulf %77, %78 : vector<1x8xf32>
    %80 = vector.broadcast %79 : vector<1x8xf32> to vector<32x8xf32>
    %81 = arith.subf %71, %80 : vector<32x8xf32>
    %82 = arith.mulf %81, %81 : vector<32x8xf32>
    %cst_66 = arith.constant dense<0.000000e+00> : vector<8xf32>
    %83 = vector.multi_reduction <add>, %82, %cst_66 [0] : vector<32x8xf32> to vector<8xf32>
    %84 = vector.shape_cast %83 : vector<8xf32> to vector<1x8xf32>
    %85 = vector.shape_cast %77 : vector<1x8xf32> to vector<1x1x8xf32>
    %c0_67 = arith.constant 0 : index
    %c0_68 = arith.constant 0 : index
    %c0_69 = arith.constant 0 : index
    %86 = vector.load %arg7[%c0_67, %c0_68, %c0_69] : memref<1x2x8xf32, #tpu.memory_space<vmem>>, vector<1x1x8xf32>
    tpu.vector_store %arg7[%c0_67, %c0_68, %c0_69], %85 {strides = array<i32>} : memref<1x2x8xf32, #tpu.memory_space<vmem>>, vector<1x1x8xf32>,
    %87 = vector.shape_cast %84 : vector<1x8xf32> to vector<1x1x8xf32>
    %c0_70 = arith.constant 0 : index
    %c1_71 = arith.constant 1 : index
    %c0_72 = arith.constant 0 : index
    %88 = vector.load %arg7[%c0_70, %c1_71, %c0_72] : memref<1x2x8xf32, #tpu.memory_space<vmem>>, vector<1x1x8xf32>
    tpu.vector_store %arg7[%c0_70, %c1_71, %c0_72], %87 {strides = array<i32>} : memref<1x2x8xf32, #tpu.memory_space<vmem>>, vector<1x1x8xf32>,
    return
  }
  func.func @transform_0(%arg0: i32, %arg1: i32) -> (i32, i32, i32, i32, i32, i32) {
    %c0_i32 = arith.constant 0 : i32
    %c0_i32_0 = arith.constant 0 : i32
    %c0_i32_1 = arith.constant 0 : i32
    %c0_i32_2 = arith.constant 0 : i32
    %c0_i32_3 = arith.constant 0 : i32
    return %arg0, %arg1, %c0_i32, %c0_i32_0, %c0_i32_1, %c0_i32_2 : i32, i32, i32, i32, i32, i32
  }
  func.func @transform_1(%arg0: i32, %arg1: i32) -> (i32, i32, i32, i32, i32, i32) {
    %c4_i32 = arith.constant 4 : i32
    %0 = arith.muli %arg1, %c4_i32 : i32
    %c1_i32 = arith.constant 1 : i32
    %1 = arith.subi %0, %c1_i32 : i32
    %c0_i32 = arith.constant 0 : i32
    %2 = arith.maxsi %1, %c0_i32 : i32
    %c0_i32_0 = arith.constant 0 : i32
    %c0_i32_1 = arith.constant 0 : i32
    %c0_i32_2 = arith.constant 0 : i32
    %c0_i32_3 = arith.constant 0 : i32
    %c0_i32_4 = arith.constant 0 : i32
    return %arg0, %2, %c0_i32_0, %c0_i32_1, %c0_i32_2, %c0_i32_3 : i32, i32, i32, i32, i32, i32
  }
  func.func @transform_2(%arg0: i32, %arg1: i32) -> (i32, i32, i32, i32, i32, i32) {
    %c4_i32 = arith.constant 4 : i32
    %0 = arith.muli %arg1, %c4_i32 : i32
    %c4_i32_0 = arith.constant 4 : i32
    %1 = arith.addi %0, %c4_i32_0 : i32
    %c7_i32 = arith.constant 7 : i32
    %2 = arith.minsi %1, %c7_i32 : i32
    %c0_i32 = arith.constant 0 : i32
    %c0_i32_1 = arith.constant 0 : i32
    %c0_i32_2 = arith.constant 0 : i32
    %c0_i32_3 = arith.constant 0 : i32
    %c0_i32_4 = arith.constant 0 : i32
    return %arg0, %2, %c0_i32, %c0_i32_1, %c0_i32_2, %c0_i32_3 : i32, i32, i32, i32, i32, i32
  }
  func.func @transform_3(%arg0: i32, %arg1: i32) -> (i32, i32) {
    %c0_i32 = arith.constant 0 : i32
    %c0_i32_0 = arith.constant 0 : i32
    %c0_i32_1 = arith.constant 0 : i32
    return %c0_i32, %c0_i32_0 : i32, i32
  }
  func.func @transform_4(%arg0: i32, %arg1: i32) -> (i32, i32, i32, i32) {
    %c0_i32 = arith.constant 0 : i32
    %c0_i32_0 = arith.constant 0 : i32
    %c0_i32_1 = arith.constant 0 : i32
    return %arg0, %arg1, %c0_i32, %c0_i32_0 : i32, i32, i32, i32
  }
  func.func @transform_5(%arg0: i32, %arg1: i32) -> (i32, i32, i32) {
    %c2_i32 = arith.constant 2 : i32
    %0 = arith.muli %arg0, %c2_i32 : i32
    %1 = arith.addi %0, %arg1 : i32
    %c0_i32 = arith.constant 0 : i32
    %c0_i32_0 = arith.constant 0 : i32
    %c0_i32_1 = arith.constant 0 : i32
    return %1, %c0_i32, %c0_i32_0 : i32, i32, i32
  }
}

</mosaic_0001>

<llo_original>
// kernel: tpu_custom_call.1
$region0: #{tpu_custom_call.1}
  #allocation0 [shape = 'u32[]', space=smem, size = 0x4, offset = 0x4, fixed_abs, tag = 'smem constant byte address 0x4 - core index']
  #allocation1 [shape = 'u32[72,128]{1,0:T(1,128)}', space=vmem, size = 0x9000, scoped, tag = 'internal scratch']
  #allocation2 [shape = 'f32[6,10,4]{2,1,0:T(8,128)}', space=vmem, size = 0xc000, scoped, tag = 'scratch operand']
  %s0 = inlined_call_operand.vmem [shape: f32[2,8,2,8,2,4], index: 0, kind: input, shape index: {}]
  %s1 = inlined_call_operand.vmem [shape: f32[2,8,2,8,2,4], index: 1, kind: input, shape index: {}]
  %s2 = inlined_call_operand.vmem [shape: f32[2,8,2,8,2,4], index: 2, kind: input, shape index: {}]
  %s3 = inlined_call_operand.vmem [shape: f32[36,8], index: 3, kind: input, shape index: {}]
  %s4 = inlined_call_operand.hbm [shape: f32[2,8,8,8], index: 4, kind: output, shape index: {0}]
  %s5 = inlined_call_operand.hbm [shape: f32[4,2,8], index: 5, kind: output, shape index: {1}]
  %6 = xla_tuple %s4, %s5
  %s7 = sld [smem:[#allocation0]]
  $region57: #{tpu_custom_call.1} parent=0
    _
  %s9 = ssub.s32 1, %s7
  %s10 = scalar_select 0, %s9, %s7
  $region1: #{tpu_custom_call.1} parent=0
    #allocation3 [shape = 'u8[32768]{0}', space=vmem, size = 0x8000, scoped, tag = 'output window, operand 0']
    #allocation4 [shape = 's32[2]{0}', space=sflag, size = 0x8, scoped, tag = 'scoped memory for tpu_custom_call.1']
    #allocation5 [shape = 'u8[2048]{0}', space=vmem, size = 0x800, scoped, tag = 'output window, operand 1']
    #allocation6 [shape = 's32[2]{0}', space=sflag, size = 0x8, scoped, tag = 'scoped memory for tpu_custom_call.1']
    %11 = vsyncpa [#allocation4], 0
    %s12 = scalar_lea.sflag [#allocation4], 1
    %13 = vsyncpa %s12, 0
    %14 = vsyncpa [#allocation6], 0
    %s15 = scalar_lea.sflag [#allocation6], 1
    %16 = vsyncpa %s15, 0
    loop: start=0, step=1, limit=6
    $region2: #{tpu_custom_call.1} parent=1 // loop_pre_header
      _
    $region3: #{tpu_custom_call.1} parent=1 // loop_header
      %s18 = sphi 0, %s22
      %p19 = scmp.ge.s32.totalorder %s18, 6
      %s25 = sphi 0, %s37
      %s26 = sphi 0, %s33
      %s27 = sphi 0, %s25
      %s28 = sphi 0, %s26
      %s29 = sphi 0, %s27
      %s30 = sphi 0, %s28
      %s42 = sphi 0, %s44
      %s45 = sphi 0, %s42
      %s46 = sphi 0, %s45
      %s62 = sphi 0, %s46
      %s78 = sphi 0, %s80
      %s81 = sphi 0, %s78
      %s82 = sphi 0, %s81
      %s98 = sphi 0, %s82
      %s114 = sphi 0, %s116
      %s117 = sphi 0, %s114
      %s118 = sphi 0, %s117
      %s134 = sphi 0, %s118
      %s138 = sphi 0, %s138
      %s140 = sphi 0, %s138
      %s141 = sphi 0, %s140
      %s155 = sphi 0, %s141
      %s163 = sphi 0, %s165
      %s166 = sphi 0, %s163
      %s167 = sphi 0, %s166
      %s183 = sphi 0, %s167
      %s193 = sphi 0, %s195
      %s196 = sphi 0, %s193
      %s197 = sphi 0, %s196
      %s213 = sphi 0, %s197
    $region4: #{tpu_custom_call.1} parent=1 // loop_header_branch
      %21 = sbr.rel (%p19) target = $region8
    $region5: #{tpu_custom_call.1} parent=1 // loop_body
      %s23 = ssub.s32 %s18, 1
      %s24 = ssub.s32 %s18, 2
      %s31 = sadd.s32 1, %s26
      %p32 = scmp.ge.s32.totalorder %s31, 2
      %s33 = scalar_select %p32, 0, %s31
      %s34 = sadd.s32 1, %s25
      %s35 = scalar_select %p32, %s34, %s25
      %p36 = scmp.ge.s32.totalorder %s35, 2
      %s37 = scalar_select %p36, 0, %s35
      %s38 = ssub.s32 %s25, %s37
      %s39 = ssub.s32 %s26, %s33
      %s40 = sor.u32 %s38, %s39
      %p41 = scmp.eq.s32.totalorder %s40, 0
      %s43 = sadd.s32 %s42, 1
      %s44 = scalar_select %p41, %s42, %s43
      %p47 = pneg %p41
      %p48 = scmp.eq.s32.totalorder %s18, 3
      %p49 = por %p47, %p48
      %p50 = scmp.ne.s32.totalorder %s42, %s45
      %p51 = scmp.eq.s32.totalorder %s18, 0
      %p52 = por %p50, %p51
      %p53 = scmp.ne.s32.totalorder %s42, %s45
      %p54 = scmp.eq.s32.totalorder %s23, 3
      %p55 = por %p53, %p54
      %p56 = scmp.ne.s32.totalorder %s45, %s46
      %p57 = scmp.eq.s32.totalorder %s23, 0
      %p58 = por %p56, %p57
      %p59 = scmp.ne.s32.totalorder %s45, %s46
      %p60 = scmp.eq.s32.totalorder %s24, 3
      %p61 = por %p59, %p60
      %p63 = scmp.ne.s32.totalorder %s46, %s62
      %p64 = scmp.eq.s32.totalorder %s24, 0
      %p65 = por %p63, %p64
      %s66 = smul.u32 %s26, 4
      %s67 = ssub.s32 %s66, 1
      %p68 = scmp.gt.s32.totalorder %s67, 0
      %s69 = scalar_select %p68, %s67, 0
      %s70 = smul.u32 %s33, 4
      %s71 = ssub.s32 %s70, 1
      %p72 = scmp.gt.s32.totalorder %s71, 0
      %s73 = scalar_select %p72, %s71, 0
      %s74 = ssub.s32 %s25, %s37
      %s75 = ssub.s32 %s69, %s73
      %s76 = sor.u32 %s74, %s75
      %p77 = scmp.eq.s32.totalorder %s76, 0
      %s79 = sadd.s32 %s78, 1
      %s80 = scalar_select %p77, %s78, %s79
      %p83 = pneg %p77
      %p84 = scmp.eq.s32.totalorder %s18, 3
      %p85 = por %p83, %p84
      %p86 = scmp.ne.s32.totalorder %s78, %s81
      %p87 = scmp.eq.s32.totalorder %s18, 0
      %p88 = por %p86, %p87
      %p89 = scmp.ne.s32.totalorder %s78, %s81
      %p90 = scmp.eq.s32.totalorder %s23, 3
      %p91 = por %p89, %p90
      %p92 = scmp.ne.s32.totalorder %s81, %s82
      %p93 = scmp.eq.s32.totalorder %s23, 0
      %p94 = por %p92, %p93
      %p95 = scmp.ne.s32.totalorder %s81, %s82
      %p96 = scmp.eq.s32.totalorder %s24, 3
      %p97 = por %p95, %p96
      %p99 = scmp.ne.s32.totalorder %s82, %s98
      %p100 = scmp.eq.s32.totalorder %s24, 0
      %p101 = por %p99, %p100
      %s102 = smul.u32 %s26, 4
      %s103 = sadd.s32 %s102, 4
      %p104 = scmp.lt.s32.totalorder %s103, 7
      %s105 = scalar_select %p104, %s103, 7
      %s106 = smul.u32 %s33, 4
      %s107 = sadd.s32 %s106, 4
      %p108 = scmp.lt.s32.totalorder %s107, 7
      %s109 = scalar_select %p108, %s107, 7
      %s110 = ssub.s32 %s25, %s37
      %s111 = ssub.s32 %s105, %s109
      %s112 = sor.u32 %s110, %s111
      %p113 = scmp.eq.s32.totalorder %s112, 0
      %s115 = sadd.s32 %s114, 1
      %s116 = scalar_select %p113, %s114, %s115
      %p119 = pneg %p113
      %p120 = scmp.eq.s32.totalorder %s18, 3
      %p121 = por %p119, %p120
      %p122 = scmp.ne.s32.totalorder %s114, %s117
      %p123 = scmp.eq.s32.totalorder %s18, 0
      %p124 = por %p122, %p123
      %p125 = scmp.ne.s32.totalorder %s114, %s117
      %p126 = scmp.eq.s32.totalorder %s23, 3
      %p127 = por %p125, %p126
      %p128 = scmp.ne.s32.totalorder %s117, %s118
      %p129 = scmp.eq.s32.totalorder %s23, 0
      %p130 = por %p128, %p129
      %p131 = scmp.ne.s32.totalorder %s117, %s118
      %p132 = scmp.eq.s32.totalorder %s24, 3
      %p133 = por %p131, %p132
      %p135 = scmp.ne.s32.totalorder %s118, %s134
      %p136 = scmp.eq.s32.totalorder %s24, 0
      %p137 = por %p135, %p136
      %s139 = sadd.s32 %s138, 1
      %p142 = scmp.eq.s32.totalorder %s18, 3
      %p143 = scmp.ne.s32.totalorder %s138, %s140
      %p144 = scmp.eq.s32.totalorder %s18, 0
      %p145 = por %p143, %p144
      %p146 = scmp.ne.s32.totalorder %s138, %s140
      %p147 = scmp.eq.s32.totalorder %s23, 3
      %p148 = por %p146, %p147
      %p149 = scmp.ne.s32.totalorder %s140, %s141
      %p150 = scmp.eq.s32.totalorder %s23, 0
      %p151 = por %p149, %p150
      %p152 = scmp.ne.s32.totalorder %s140, %s141
      %p153 = scmp.eq.s32.totalorder %s24, 3
      %p154 = por %p152, %p153
      %p156 = scmp.ne.s32.totalorder %s141, %s155
      %p157 = scmp.eq.s32.totalorder %s24, 0
      %p158 = por %p156, %p157
      %s159 = ssub.s32 %s25, %s37
      %s160 = ssub.s32 %s26, %s33
      %s161 = sor.u32 %s159, %s160
      %p162 = scmp.eq.s32.totalorder %s161, 0
      %s164 = sadd.s32 %s163, 1
      %s165 = scalar_select %p162, %s163, %s164
      %p168 = pneg %p162
      %p169 = scmp.eq.s32.totalorder %s18, 3
      %p170 = por %p168, %p169
      %p171 = scmp.ne.s32.totalorder %s163, %s166
      %p172 = scmp.eq.s32.totalorder %s18, 0
      %p173 = por %p171, %p172
      %p174 = scmp.ne.s32.totalorder %s163, %s166
      %p175 = scmp.eq.s32.totalorder %s23, 3
      %p176 = por %p174, %p175
      %p177 = scmp.ne.s32.totalorder %s166, %s167
      %p178 = scmp.eq.s32.totalorder %s23, 0
      %p179 = por %p177, %p178
      %p180 = scmp.ne.s32.totalorder %s166, %s167
      %p181 = scmp.eq.s32.totalorder %s24, 3
      %p182 = por %p180, %p181
      %p184 = scmp.ne.s32.totalorder %s167, %s183
      %p185 = scmp.eq.s32.totalorder %s24, 0
      %p186 = por %p184, %p185
      %s187 = smul.u32 %s25, 2
      %s188 = sadd.s32 %s187, %s26
      %s189 = smul.u32 %s37, 2
      %s190 = sadd.s32 %s189, %s33
      %s191 = ssub.s32 %s188, %s190
      %p192 = scmp.eq.s32.totalorder %s191, 0
      %s194 = sadd.s32 %s193, 1
      %s195 = scalar_select %p192, %s193, %s194
      %p198 = pneg %p192
      %p199 = scmp.eq.s32.totalorder %s18, 3
      %p200 = por %p198, %p199
      %p201 = scmp.ne.s32.totalorder %s193, %s196
      %p202 = scmp.eq.s32.totalorder %s18, 0
      %p203 = por %p201, %p202
      %p204 = scmp.ne.s32.totalorder %s193, %s196
      %p205 = scmp.eq.s32.totalorder %s23, 3
      %p206 = por %p204, %p205
      %p207 = scmp.ne.s32.totalorder %s196, %s197
      %p208 = scmp.eq.s32.totalorder %s23, 0
      %p209 = por %p207, %p208
      %p210 = scmp.ne.s32.totalorder %s196, %s197
      %p211 = scmp.eq.s32.totalorder %s24, 3
      %p212 = por %p210, %p211
      %p214 = scmp.ne.s32.totalorder %s197, %s213
      %p215 = scmp.eq.s32.totalorder %s24, 0
      %p216 = por %p214, %p215
      %p217 = scmp.le.s32.totalorder 1, %s18
      %p218 = scmp.lt.s32.totalorder %s18, 5
      %p219 = pnand %p217, %p218
      %p220 = pneg %p219
      // Predicated region
      $region9: #{tpu_custom_call.1} parent=5 // pred_check
        _
      $region10: #{tpu_custom_call.1} parent=5 // pred_check_branch
        %222 = sbr.rel (%p219) target = $region12
      $region11: #{tpu_custom_call.1} parent=5 // pred_region
        %s223 = ssub.s32 %s18, 1
        // Predicated region
        $region13: #{tpu_custom_call.1} parent=11 // pred_check
          %p224 = pneg %p151
        $region14: #{tpu_custom_call.1} parent=11 // pred_check_branch
          %226 = sbr.rel (%p224) target = $region16
        $region15: #{tpu_custom_call.1} parent=11 // pred_region
          _
        $region16: #{tpu_custom_call.1} parent=11 // pred_fallthru
          _
      $region12: #{tpu_custom_call.1} parent=5 // pred_fallthru
        _
      %p227 = scmp.lt.s32.totalorder %s18, 4
      // Predicated region
      $region17: #{tpu_custom_call.1} parent=5 // pred_check
        %p228 = pneg %p227
      $region18: #{tpu_custom_call.1} parent=5 // pred_check_branch
        %230 = sbr.rel (%p228) target = $region20
      $region19: #{tpu_custom_call.1} parent=5 // pred_region
        // Predicated region
        $region21: #{tpu_custom_call.1} parent=19 // pred_check
          %p231 = pneg %p52
        $region22: #{tpu_custom_call.1} parent=19 // pred_check_branch
          %233 = sbr.rel (%p231) target = $region24
        $region23: #{tpu_custom_call.1} parent=19 // pred_region
          %s234 = smul.u32 4, %s26
          %p235 = scmp.lt.s32.totalorder %s25, 1
          %s236 = scalar_select %p235, %s25, 1
          %p237 = scmp.lt.s32.totalorder %s234, 7
          %s238 = scalar_select %p237, %s234, 7
          %s239 = smul.addr %s238, 16
          %s240 = smul.addr %s236, 128
          %s241 = sadd.s32 %s239, %s240
          %s242 = smul.addr %s241, 2
          %s243 = scalar_lea.vmem %s0, %s242
          %s244 = smul.u32 4, %s26
        $region24: #{tpu_custom_call.1} parent=19 // pred_fallthru
          _
        // Predicated region
        $region25: #{tpu_custom_call.1} parent=19 // pred_check
          %p245 = pneg %p88
        $region26: #{tpu_custom_call.1} parent=19 // pred_check_branch
          %247 = sbr.rel (%p245) target = $region28
        $region27: #{tpu_custom_call.1} parent=19 // pred_region
          %s248 = smul.u32 %s26, 4
          %s249 = ssub.s32 %s248, 1
          %p250 = scmp.gt.s32.totalorder %s249, 0
          %s251 = scalar_select %p250, %s249, 0
          %p252 = scmp.lt.s32.totalorder %s25, 1
          %s253 = scalar_select %p252, %s25, 1
          %p254 = scmp.lt.s32.totalorder %s251, 7
          %s255 = scalar_select %p254, %s251, 7
          %s256 = smul.addr %s255, 16
          %s257 = smul.addr %s253, 128
          %s258 = sadd.s32 %s256, %s257
          %s259 = smul.addr %s258, 2
          %s260 = scalar_lea.vmem %s1, %s259
          %s261 = smul.u32 %s26, 4
          %s262 = ssub.s32 %s261, 1
          %p263 = scmp.gt.s32.totalorder %s262, 0
          %s264 = scalar_select %p263, %s262, 0
        $region28: #{tpu_custom_call.1} parent=19 // pred_fallthru
          _
        // Predicated region
        $region29: #{tpu_custom_call.1} parent=19 // pred_check
          %p265 = pneg %p124
        $region30: #{tpu_custom_call.1} parent=19 // pred_check_branch
          %267 = sbr.rel (%p265) target = $region32
        $region31: #{tpu_custom_call.1} parent=19 // pred_region
          %s268 = smul.u32 %s26, 4
          %s269 = sadd.s32 %s268, 4
          %p270 = scmp.lt.s32.totalorder %s269, 7
          %s271 = scalar_select %p270, %s269, 7
          %p272 = scmp.lt.s32.totalorder %s25, 1
          %s273 = scalar_select %p272, %s25, 1
          %p274 = scmp.lt.s32.totalorder %s271, 7
          %s275 = scalar_select %p274, %s271, 7
          %s276 = smul.addr %s275, 16
          %s277 = smul.addr %s273, 128
          %s278 = sadd.s32 %s276, %s277
          %s279 = smul.addr %s278, 2
          %s280 = scalar_lea.vmem %s2, %s279
          %s281 = smul.u32 %s26, 4
          %s282 = sadd.s32 %s281, 4
          %p283 = scmp.lt.s32.totalorder %s282, 7
          %s284 = scalar_select %p283, %s282, 7
        $region32: #{tpu_custom_call.1} parent=19 // pred_fallthru
          _
      $region20: #{tpu_custom_call.1} parent=5 // pred_fallthru
        _
      %p285 = scmp.le.s32.totalorder 1, %s18
      %p286 = scmp.lt.s32.totalorder %s18, 5
      %p287 = pnand %p285, %p286
      %p288 = pneg %p287
      // Predicated region
      $region33: #{tpu_custom_call.1} parent=5 // pred_check
        _
      $region34: #{tpu_custom_call.1} parent=5 // pred_check_branch
        %290 = sbr.rel (%p287) target = $region36
      $region35: #{tpu_custom_call.1} parent=5 // pred_region
        %s291 = ssub.s32 %s18, 1
        %s292 = smul.u32 4, %s28
        %p293 = scmp.lt.s32.totalorder %s27, 1
        %s294 = scalar_select %p293, %s27, 1
        %p295 = scmp.lt.s32.totalorder %s292, 7
        %s296 = scalar_select %p295, %s292, 7
        %s297 = smul.addr %s296, 16
        %s298 = smul.addr %s294, 128
        %s299 = sadd.s32 %s297, %s298
        %s300 = smul.addr %s299, 2
        %s301 = scalar_lea.vmem %s0, %s300
        %p302 = pneg %p58
        %p303 = pneg %p55
        %s304 = smul.u32 %s28, 4
        %s305 = ssub.s32 %s304, 1
        %p306 = scmp.gt.s32.totalorder %s305, 0
        %s307 = scalar_select %p306, %s305, 0
        %p308 = scmp.lt.s32.totalorder %s27, 1
        %s309 = scalar_select %p308, %s27, 1
        %p310 = scmp.lt.s32.totalorder %s307, 7
        %s311 = scalar_select %p310, %s307, 7
        %s312 = smul.addr %s311, 16
        %s313 = smul.addr %s309, 128
        %s314 = sadd.s32 %s312, %s313
        %s315 = smul.addr %s314, 2
        %s316 = scalar_lea.vmem %s1, %s315
        %p317 = pneg %p94
        %p318 = pneg %p91
        %s319 = smul.u32 %s28, 4
        %s320 = sadd.s32 %s319, 4
        %p321 = scmp.lt.s32.totalorder %s320, 7
        %s322 = scalar_select %p321, %s320, 7
        %p323 = scmp.lt.s32.totalorder %s27, 1
        %s324 = scalar_select %p323, %s27, 1
        %p325 = scmp.lt.s32.totalorder %s322, 7
        %s326 = scalar_select %p325, %s322, 7
        %s327 = smul.addr %s326, 16
        %s328 = smul.addr %s324, 128
        %s329 = sadd.s32 %s327, %s328
        %s330 = smul.addr %s329, 2
        %s331 = scalar_lea.vmem %s2, %s330
        %p332 = pneg %p130
        %p333 = pneg %p127
        %p334 = pneg %p151
        %p335 = pneg %p148
        %p336 = pneg %p179
        %p337 = pneg %p176
        %s338 = sand.u32 %s166, 1
        %s339 = scalar_lea.sflag [#allocation4], %s338
        %s340 = sand.u32 %s166, 1
        %s341 = smul.addr %s340, 32
        %s342 = scalar_lea.vmem [#allocation3], %s341
        %p343 = pneg %p209
        %p344 = pneg %p206
        %s345 = sand.u32 %s196, 1
        %s346 = scalar_lea.sflag [#allocation6], %s345
        %s347 = sand.u32 %s196, 1
        %s348 = smul.addr %s347, 2
        %s349 = scalar_lea.vmem [#allocation5], %s348
        %s350 = smul.u32 4, %s28
        %p351 = scmp.lt.s32.totalorder %s27, 1
        %s352 = scalar_select %p351, %s27, 1
        %p353 = scmp.lt.s32.totalorder %s350, 7
        %s354 = scalar_select %p353, %s350, 7
        %s355 = smul.addr %s354, 16
        %s356 = smul.addr %s352, 128
        %s357 = sadd.s32 %s355, %s356
        %s358 = smul.addr %s357, 2
        %s359 = scalar_lea.vmem %s0, %s358
        %s360 = smul.u32 4, %s28
        %s361 = smul.u32 %s28, 4
        %s362 = ssub.s32 %s361, 1
        %p363 = scmp.gt.s32.totalorder %s362, 0
        %s364 = scalar_select %p363, %s362, 0
        %p365 = scmp.lt.s32.totalorder %s27, 1
        %s366 = scalar_select %p365, %s27, 1
        %p367 = scmp.lt.s32.totalorder %s364, 7
        %s368 = scalar_select %p367, %s364, 7
        %s369 = smul.addr %s368, 16
        %s370 = smul.addr %s366, 128
        %s371 = sadd.s32 %s369, %s370
        %s372 = smul.addr %s371, 2
        %s373 = scalar_lea.vmem %s1, %s372
        %s374 = smul.u32 %s28, 4
        %s375 = ssub.s32 %s374, 1
        %p376 = scmp.gt.s32.totalorder %s375, 0
        %s377 = scalar_select %p376, %s375, 0
        %s378 = smul.u32 %s28, 4
        %s379 = sadd.s32 %s378, 4
        %p380 = scmp.lt.s32.totalorder %s379, 7
        %s381 = scalar_select %p380, %s379, 7
        %p382 = scmp.lt.s32.totalorder %s27, 1
        %s383 = scalar_select %p382, %s27, 1
        %p384 = scmp.lt.s32.totalorder %s381, 7
        %s385 = scalar_select %p384, %s381, 7
        %s386 = smul.addr %s385, 16
        %s387 = smul.addr %s383, 128
        %s388 = sadd.s32 %s386, %s387
        %s389 = smul.addr %s388, 2
        %s390 = scalar_lea.vmem %s2, %s389
        %s391 = smul.u32 %s28, 4
        %s392 = sadd.s32 %s391, 4
        %p393 = scmp.lt.s32.totalorder %s392, 7
        %s394 = scalar_select %p393, %s392, 7
        %s395 = smul.u32 4, %s28
        %s396 = smul.u32 %s27, 2
        %s397 = sadd.s32 %s396, %s28
        %v398 = vld [vmem:[%s359] sm:$0x3]
        %v399 = vld [vmem:[%s359 + $0x2] sm:$0x3]
        %v400 = vld [vmem:[%s359 + $0x4] sm:$0x3]
        %v401 = vld [vmem:[%s359 + $0x6] sm:$0x3]
        %v402 = vld [vmem:[%s359 + $0x8] sm:$0x3]
        %v403 = vld [vmem:[%s359 + $0xa] sm:$0x3]
        %v404 = vld [vmem:[%s359 + $0xc] sm:$0x3]
        %v405 = vld [vmem:[%s359 + $0xe] sm:$0x3]
        %v406 = vld [vmem:[%s359 + $0x10] sm:$0x3]
        %v407 = vld [vmem:[%s359 + $0x12] sm:$0x3]
        %v408 = vld [vmem:[%s359 + $0x14] sm:$0x3]
        %v409 = vld [vmem:[%s359 + $0x16] sm:$0x3]
        %v410 = vld [vmem:[%s359 + $0x18] sm:$0x3]
        %v411 = vld [vmem:[%s359 + $0x1a] sm:$0x3]
        %v412 = vld [vmem:[%s359 + $0x1c] sm:$0x3]
        %v413 = vld [vmem:[%s359 + $0x1e] sm:$0x3]
        %v414 = vld [vmem:[%s359 + $0x20] sm:$0x3]
        %v415 = vld [vmem:[%s359 + $0x22] sm:$0x3]
        %v416 = vld [vmem:[%s359 + $0x24] sm:$0x3]
        %v417 = vld [vmem:[%s359 + $0x26] sm:$0x3]
        %v418 = vld [vmem:[%s359 + $0x28] sm:$0x3]
        %v419 = vld [vmem:[%s359 + $0x2a] sm:$0x3]
        %v420 = vld [vmem:[%s359 + $0x2c] sm:$0x3]
        %v421 = vld [vmem:[%s359 + $0x2e] sm:$0x3]
        %v422 = vld [vmem:[%s359 + $0x30] sm:$0x3]
        %v423 = vld [vmem:[%s359 + $0x32] sm:$0x3]
        %v424 = vld [vmem:[%s359 + $0x34] sm:$0x3]
        %v425 = vld [vmem:[%s359 + $0x36] sm:$0x3]
        %v426 = vld [vmem:[%s359 + $0x38] sm:$0x3]
        %v427 = vld [vmem:[%s359 + $0x3a] sm:$0x3]
        %v428 = vld [vmem:[%s359 + $0x3c] sm:$0x3]
        %v429 = vld [vmem:[%s359 + $0x3e] sm:$0x3]
        %v430 = vld [vmem:[%s359 + $0x40] sm:$0x3]
        %v431 = vld [vmem:[%s359 + $0x42] sm:$0x3]
        %v432 = vld [vmem:[%s359 + $0x44] sm:$0x3]
        %v433 = vld [vmem:[%s359 + $0x46] sm:$0x3]
        %v434 = vld [vmem:[%s359 + $0x48] sm:$0x3]
        %v435 = vld [vmem:[%s359 + $0x4a] sm:$0x3]
        %v436 = vld [vmem:[%s359 + $0x4c] sm:$0x3]
        %v437 = vld [vmem:[%s359 + $0x4e] sm:$0x3]
        %v438 = vld [vmem:[%s359 + $0x50] sm:$0x3]
        %v439 = vld [vmem:[%s359 + $0x52] sm:$0x3]
        %v440 = vld [vmem:[%s359 + $0x54] sm:$0x3]
        %v441 = vld [vmem:[%s359 + $0x56] sm:$0x3]
        %v442 = vld [vmem:[%s359 + $0x58] sm:$0x3]
        %v443 = vld [vmem:[%s359 + $0x5a] sm:$0x3]
        %v444 = vld [vmem:[%s359 + $0x5c] sm:$0x3]
        %v445 = vld [vmem:[%s359 + $0x5e] sm:$0x3]
        %v446 = vld [vmem:[%s359 + $0x60] sm:$0x3]
        %v447 = vld [vmem:[%s359 + $0x62] sm:$0x3]
        %v448 = vld [vmem:[%s359 + $0x64] sm:$0x3]
        %v449 = vld [vmem:[%s359 + $0x66] sm:$0x3]
        %v450 = vld [vmem:[%s359 + $0x68] sm:$0x3]
        %v451 = vld [vmem:[%s359 + $0x6a] sm:$0x3]
        %v452 = vld [vmem:[%s359 + $0x6c] sm:$0x3]
        %v453 = vld [vmem:[%s359 + $0x6e] sm:$0x3]
        %v454 = vld [vmem:[%s359 + $0x70] sm:$0x3]
        %v455 = vld [vmem:[%s359 + $0x72] sm:$0x3]
        %v456 = vld [vmem:[%s359 + $0x74] sm:$0x3]
        %v457 = vld [vmem:[%s359 + $0x76] sm:$0x3]
        %v458 = vld [vmem:[%s359 + $0x78] sm:$0x3]
        %v459 = vld [vmem:[%s359 + $0x7a] sm:$0x3]
        %v460 = vld [vmem:[%s359 + $0x7c] sm:$0x3]
        %v461 = vld [vmem:[%s359 + $0x7e] sm:$0x3]
        %v494 = vrot.slane %v398, 1
        %v495 = vrot.slane %v399, 1
        %v496 = vrot.slane %v400, 1
        %v497 = vrot.slane %v401, 1
        %v498 = vrot.slane %v402, 1
        %v499 = vrot.slane %v403, 1
        %v500 = vrot.slane %v404, 1
        %v501 = vrot.slane %v405, 1
        %v502 = vrot.slane %v414, 1
        %v503 = vrot.slane %v415, 1
        %v504 = vrot.slane %v416, 1
        %v505 = vrot.slane %v417, 1
        %v506 = vrot.slane %v418, 1
        %v507 = vrot.slane %v419, 1
        %v508 = vrot.slane %v420, 1
        %v509 = vrot.slane %v421, 1
        %v510 = vrot.slane %v430, 1
        %v511 = vrot.slane %v431, 1
        %v512 = vrot.slane %v432, 1
        %v513 = vrot.slane %v433, 1
        %v514 = vrot.slane %v434, 1
        %v515 = vrot.slane %v435, 1
        %v516 = vrot.slane %v436, 1
        %v517 = vrot.slane %v437, 1
        %v518 = vrot.slane %v446, 1
        %v519 = vrot.slane %v447, 1
        %v520 = vrot.slane %v448, 1
        %v521 = vrot.slane %v449, 1
        %v522 = vrot.slane %v450, 1
        %v523 = vrot.slane %v451, 1
        %v524 = vrot.slane %v452, 1
        %v525 = vrot.slane %v453, 1
        %v558 = vmax.f32 %v398, %v494
        %v559 = vmax.f32 %v399, %v495
        %v560 = vmax.f32 %v400, %v496
        %v561 = vmax.f32 %v401, %v497
        %v562 = vmax.f32 %v402, %v498
        %v563 = vmax.f32 %v403, %v499
        %v564 = vmax.f32 %v404, %v500
        %v565 = vmax.f32 %v405, %v501
        %v566 = vmax.f32 %v414, %v502
        %v567 = vmax.f32 %v415, %v503
        %v568 = vmax.f32 %v416, %v504
        %v569 = vmax.f32 %v417, %v505
        %v570 = vmax.f32 %v418, %v506
        %v571 = vmax.f32 %v419, %v507
        %v572 = vmax.f32 %v420, %v508
        %v573 = vmax.f32 %v421, %v509
        %v574 = vmax.f32 %v430, %v510
        %v575 = vmax.f32 %v431, %v511
        %v576 = vmax.f32 %v432, %v512
        %v577 = vmax.f32 %v433, %v513
        %v578 = vmax.f32 %v434, %v514
        %v579 = vmax.f32 %v435, %v515
        %v580 = vmax.f32 %v436, %v516
        %v581 = vmax.f32 %v437, %v517
        %v582 = vmax.f32 %v446, %v518
        %v583 = vmax.f32 %v447, %v519
        %v584 = vmax.f32 %v448, %v520
        %v585 = vmax.f32 %v449, %v521
        %v586 = vmax.f32 %v450, %v522
        %v587 = vmax.f32 %v451, %v523
        %v588 = vmax.f32 %v452, %v524
        %v589 = vmax.f32 %v453, %v525
        %v622 = vrot.slane %v406, 1
        %v623 = vrot.slane %v407, 1
        %v624 = vrot.slane %v408, 1
        %v625 = vrot.slane %v409, 1
        %v626 = vrot.slane %v410, 1
        %v627 = vrot.slane %v411, 1
        %v628 = vrot.slane %v412, 1
        %v629 = vrot.slane %v413, 1
        %v630 = vrot.slane %v422, 1
        %v631 = vrot.slane %v423, 1
        %v632 = vrot.slane %v424, 1
        %v633 = vrot.slane %v425, 1
        %v634 = vrot.slane %v426, 1
        %v635 = vrot.slane %v427, 1
        %v636 = vrot.slane %v428, 1
        %v637 = vrot.slane %v429, 1
        %v638 = vrot.slane %v438, 1
        %v639 = vrot.slane %v439, 1
        %v640 = vrot.slane %v440, 1
        %v641 = vrot.slane %v441, 1
        %v642 = vrot.slane %v442, 1
        %v643 = vrot.slane %v443, 1
        %v644 = vrot.slane %v444, 1
        %v645 = vrot.slane %v445, 1
        %v646 = vrot.slane %v454, 1
        %v647 = vrot.slane %v455, 1
        %v648 = vrot.slane %v456, 1
        %v649 = vrot.slane %v457, 1
        %v650 = vrot.slane %v458, 1
        %v651 = vrot.slane %v459, 1
        %v652 = vrot.slane %v460, 1
        %v653 = vrot.slane %v461, 1
        %v686 = vmax.f32 %v406, %v622
        %v687 = vmax.f32 %v407, %v623
        %v688 = vmax.f32 %v408, %v624
        %v689 = vmax.f32 %v409, %v625
        %v690 = vmax.f32 %v410, %v626
        %v691 = vmax.f32 %v411, %v627
        %v692 = vmax.f32 %v412, %v628
        %v693 = vmax.f32 %v413, %v629
        %v694 = vmax.f32 %v422, %v630
        %v695 = vmax.f32 %v423, %v631
        %v696 = vmax.f32 %v424, %v632
        %v697 = vmax.f32 %v425, %v633
        %v698 = vmax.f32 %v426, %v634
        %v699 = vmax.f32 %v427, %v635
        %v700 = vmax.f32 %v428, %v636
        %v701 = vmax.f32 %v429, %v637
        %v702 = vmax.f32 %v438, %v638
        %v703 = vmax.f32 %v439, %v639
        %v704 = vmax.f32 %v440, %v640
        %v705 = vmax.f32 %v441, %v641
        %v706 = vmax.f32 %v442, %v642
        %v707 = vmax.f32 %v443, %v643
        %v708 = vmax.f32 %v444, %v644
        %v709 = vmax.f32 %v445, %v645
        %v710 = vmax.f32 %v454, %v646
        %v711 = vmax.f32 %v455, %v647
        %v712 = vmax.f32 %v456, %v648
        %v713 = vmax.f32 %v457, %v649
        %v714 = vmax.f32 %v458, %v650
        %v715 = vmax.f32 %v459, %v651
        %v716 = vmax.f32 %v460, %v652
        %v717 = vmax.f32 %v461, %v653
        %v718 = vmax.f32 %v558, %v686
        %v719 = vmax.f32 %v559, %v687
        %v720 = vmax.f32 %v560, %v688
        %v721 = vmax.f32 %v561, %v689
        %v722 = vmax.f32 %v562, %v690
        %v723 = vmax.f32 %v563, %v691
        %v724 = vmax.f32 %v564, %v692
        %v725 = vmax.f32 %v565, %v693
        %v726 = vmax.f32 %v566, %v694
        %v727 = vmax.f32 %v567, %v695
        %v728 = vmax.f32 %v568, %v696
        %v729 = vmax.f32 %v569, %v697
        %v730 = vmax.f32 %v570, %v698
        %v731 = vmax.f32 %v571, %v699
        %v732 = vmax.f32 %v572, %v700
        %v733 = vmax.f32 %v573, %v701
        %v734 = vmax.f32 %v574, %v702
        %v735 = vmax.f32 %v575, %v703
        %v736 = vmax.f32 %v576, %v704
        %v737 = vmax.f32 %v577, %v705
        %v738 = vmax.f32 %v578, %v706
        %v739 = vmax.f32 %v579, %v707
        %v740 = vmax.f32 %v580, %v708
        %v741 = vmax.f32 %v581, %v709
        %v742 = vmax.f32 %v582, %v710
        %v743 = vmax.f32 %v583, %v711
        %v744 = vmax.f32 %v584, %v712
        %v745 = vmax.f32 %v585, %v713
        %v746 = vmax.f32 %v586, %v714
        %v747 = vmax.f32 %v587, %v715
        %v748 = vmax.f32 %v588, %v716
        %v749 = vmax.f32 %v589, %v717
        %v750 = vld [vmem:[%s373] sm:$0x3]
        %v751 = vld [vmem:[%s373 + $0x2] sm:$0x3]
        %v752 = vld [vmem:[%s373 + $0x4] sm:$0x3]
        %v753 = vld [vmem:[%s373 + $0x6] sm:$0x3]
        %v754 = vld [vmem:[%s373 + $0x8] sm:$0x3]
        %v755 = vld [vmem:[%s373 + $0xa] sm:$0x3]
        %v756 = vld [vmem:[%s373 + $0xc] sm:$0x3]
        %v757 = vld [vmem:[%s373 + $0xe] sm:$0x3]
        %v758 = vld [vmem:[%s373 + $0x10] sm:$0x3]
        %v759 = vld [vmem:[%s373 + $0x12] sm:$0x3]
        %v760 = vld [vmem:[%s373 + $0x14] sm:$0x3]
        %v761 = vld [vmem:[%s373 + $0x16] sm:$0x3]
        %v762 = vld [vmem:[%s373 + $0x18] sm:$0x3]
        %v763 = vld [vmem:[%s373 + $0x1a] sm:$0x3]
        %v764 = vld [vmem:[%s373 + $0x1c] sm:$0x3]
        %v765 = vld [vmem:[%s373 + $0x1e] sm:$0x3]
        %v774 = vrot.slane %v750, 1
        %v775 = vrot.slane %v751, 1
        %v776 = vrot.slane %v752, 1
        %v777 = vrot.slane %v753, 1
        %v778 = vrot.slane %v754, 1
        %v779 = vrot.slane %v755, 1
        %v780 = vrot.slane %v756, 1
        %v781 = vrot.slane %v757, 1
        %v790 = vmax.f32 %v750, %v774
        %v791 = vmax.f32 %v751, %v775
        %v792 = vmax.f32 %v752, %v776
        %v793 = vmax.f32 %v753, %v777
        %v794 = vmax.f32 %v754, %v778
        %v795 = vmax.f32 %v755, %v779
        %v796 = vmax.f32 %v756, %v780
        %v797 = vmax.f32 %v757, %v781
        %v806 = vrot.slane %v758, 1
        %v807 = vrot.slane %v759, 1
        %v808 = vrot.slane %v760, 1
        %v809 = vrot.slane %v761, 1
        %v810 = vrot.slane %v762, 1
        %v811 = vrot.slane %v763, 1
        %v812 = vrot.slane %v764, 1
        %v813 = vrot.slane %v765, 1
        %v822 = vmax.f32 %v758, %v806
        %v823 = vmax.f32 %v759, %v807
        %v824 = vmax.f32 %v760, %v808
        %v825 = vmax.f32 %v761, %v809
        %v826 = vmax.f32 %v762, %v810
        %v827 = vmax.f32 %v763, %v811
        %v828 = vmax.f32 %v764, %v812
        %v829 = vmax.f32 %v765, %v813
        %v830 = vmax.f32 %v790, %v822
        %v831 = vmax.f32 %v791, %v823
        %v832 = vmax.f32 %v792, %v824
        %v833 = vmax.f32 %v793, %v825
        %v834 = vmax.f32 %v794, %v826
        %v835 = vmax.f32 %v795, %v827
        %v836 = vmax.f32 %v796, %v828
        %v837 = vmax.f32 %v797, %v829
        %v838 = vld [vmem:[%s390] sm:$0x3]
        %v839 = vld [vmem:[%s390 + $0x2] sm:$0x3]
        %v840 = vld [vmem:[%s390 + $0x4] sm:$0x3]
        %v841 = vld [vmem:[%s390 + $0x6] sm:$0x3]
        %v842 = vld [vmem:[%s390 + $0x8] sm:$0x3]
        %v843 = vld [vmem:[%s390 + $0xa] sm:$0x3]
        %v844 = vld [vmem:[%s390 + $0xc] sm:$0x3]
        %v845 = vld [vmem:[%s390 + $0xe] sm:$0x3]
        %v846 = vld [vmem:[%s390 + $0x10] sm:$0x3]
        %v847 = vld [vmem:[%s390 + $0x12] sm:$0x3]
        %v848 = vld [vmem:[%s390 + $0x14] sm:$0x3]
        %v849 = vld [vmem:[%s390 + $0x16] sm:$0x3]
        %v850 = vld [vmem:[%s390 + $0x18] sm:$0x3]
        %v851 = vld [vmem:[%s390 + $0x1a] sm:$0x3]
        %v852 = vld [vmem:[%s390 + $0x1c] sm:$0x3]
        %v853 = vld [vmem:[%s390 + $0x1e] sm:$0x3]
        %v862 = vrot.slane %v838, 1
        %v863 = vrot.slane %v839, 1
        %v864 = vrot.slane %v840, 1
        %v865 = vrot.slane %v841, 1
        %v866 = vrot.slane %v842, 1
        %v867 = vrot.slane %v843, 1
        %v868 = vrot.slane %v844, 1
        %v869 = vrot.slane %v845, 1
        %v878 = vmax.f32 %v838, %v862
        %v879 = vmax.f32 %v839, %v863
        %v880 = vmax.f32 %v840, %v864
        %v881 = vmax.f32 %v841, %v865
        %v882 = vmax.f32 %v842, %v866
        %v883 = vmax.f32 %v843, %v867
        %v884 = vmax.f32 %v844, %v868
        %v885 = vmax.f32 %v845, %v869
        %v894 = vrot.slane %v846, 1
        %v895 = vrot.slane %v847, 1
        %v896 = vrot.slane %v848, 1
        %v897 = vrot.slane %v849, 1
        %v898 = vrot.slane %v850, 1
        %v899 = vrot.slane %v851, 1
        %v900 = vrot.slane %v852, 1
        %v901 = vrot.slane %v853, 1
        %v910 = vmax.f32 %v846, %v894
        %v911 = vmax.f32 %v847, %v895
        %v912 = vmax.f32 %v848, %v896
        %v913 = vmax.f32 %v849, %v897
        %v914 = vmax.f32 %v850, %v898
        %v915 = vmax.f32 %v851, %v899
        %v916 = vmax.f32 %v852, %v900
        %v917 = vmax.f32 %v853, %v901
        %v918 = vmax.f32 %v878, %v910
        %v919 = vmax.f32 %v879, %v911
        %v920 = vmax.f32 %v880, %v912
        %v921 = vmax.f32 %v881, %v913
        %v922 = vmax.f32 %v882, %v914
        %v923 = vmax.f32 %v883, %v915
        %v924 = vmax.f32 %v884, %v916
        %v925 = vmax.f32 %v885, %v917
        %vm926 = vcmask 24576
        %927 = vst.msk [vmem:[#allocation2] sm:$0x1] %vm926, 0.0
        %928 = vst.msk [vmem:[#allocation2 + $0x10] sm:$0x1] %vm926, 0.0
        %929 = vst.msk [vmem:[#allocation2 + $0x20] sm:$0x1] %vm926, 0.0
        %930 = vst.msk [vmem:[#allocation2 + $0x30] sm:$0x1] %vm926, 0.0
        %931 = vst.msk [vmem:[#allocation2 + $0x40] sm:$0x1] %vm926, 0.0
        %932 = vst.msk [vmem:[#allocation2 + $0x50] sm:$0x1] %vm926, 0.0
        %933 = vst.msk [vmem:[#allocation2 + $0x9] sm:$0x1] %vm926, 0.0
        %934 = vst.msk [vmem:[#allocation2 + $0x19] sm:$0x1] %vm926, 0.0
        %935 = vst.msk [vmem:[#allocation2 + $0x29] sm:$0x1] %vm926, 0.0
        %936 = vst.msk [vmem:[#allocation2 + $0x39] sm:$0x1] %vm926, 0.0
        %937 = vst.msk [vmem:[#allocation2 + $0x49] sm:$0x1] %vm926, 0.0
        %938 = vst.msk [vmem:[#allocation2 + $0x59] sm:$0x1] %vm926, 0.0
        %v971 = vrot.slane %v719, 7
        %vm972 = vcmask 1041409
        %v973 = vsel %vm972, %v971, %v718
        %v974 = vrot.slane %v720, 6
        %vm975 = vcmask 1042434
        %v976 = vsel %vm975, %v974, %v973
        %v977 = vrot.slane %v721, 5
        %vm978 = vcmask 1043459
        %v979 = vsel %vm978, %v977, %v976
        %v980 = vrot.slane %v722, 4
        %vm981 = vcmask 1044484
        %v982 = vsel %vm981, %v980, %v979
        %v983 = vrot.slane %v723, 3
        %vm984 = vcmask 1045509
        %v985 = vsel %vm984, %v983, %v982
        %v986 = vrot.slane %v724, 2
        %vm987 = vcmask 1046534
        %v988 = vsel %vm987, %v986, %v985
        %v989 = vrot.slane %v725, 1
        %vm990 = vcmask 1047559
        %v991 = vsel %vm990, %v989, %v988
        %v992 = vrot.slane %v727, 7
        %v993 = vsel %vm972, %v992, %v726
        %v994 = vrot.slane %v728, 6
        %v995 = vsel %vm975, %v994, %v993
        %v996 = vrot.slane %v729, 5
        %v997 = vsel %vm978, %v996, %v995
        %v998 = vrot.slane %v730, 4
        %v999 = vsel %vm981, %v998, %v997
        %v1000 = vrot.slane %v731, 3
        %v1001 = vsel %vm984, %v1000, %v999
        %v1002 = vrot.slane %v732, 2
        %v1003 = vsel %vm987, %v1002, %v1001
        %v1004 = vrot.slane %v733, 1
        %v1005 = vsel %vm990, %v1004, %v1003
        %v1006 = vrot.slane %v735, 7
        %v1007 = vsel %vm972, %v1006, %v734
        %v1008 = vrot.slane %v736, 6
        %v1009 = vsel %vm975, %v1008, %v1007
        %v1010 = vrot.slane %v737, 5
        %v1011 = vsel %vm978, %v1010, %v1009
        %v1012 = vrot.slane %v738, 4
        %v1013 = vsel %vm981, %v1012, %v1011
        %v1014 = vrot.slane %v739, 3
        %v1015 = vsel %vm984, %v1014, %v1013
        %v1016 = vrot.slane %v740, 2
        %v1017 = vsel %vm987, %v1016, %v1015
        %v1018 = vrot.slane %v741, 1
        %v1019 = vsel %vm990, %v1018, %v1017
        %v1020 = vrot.slane %v743, 7
        %v1021 = vsel %vm972, %v1020, %v742
        %v1022 = vrot.slane %v744, 6
        %v1023 = vsel %vm975, %v1022, %v1021
        %v1024 = vrot.slane %v745, 5
        %v1025 = vsel %vm978, %v1024, %v1023
        %v1026 = vrot.slane %v746, 4
        %v1027 = vsel %vm981, %v1026, %v1025
        %v1028 = vrot.slane %v747, 3
        %v1029 = vsel %vm984, %v1028, %v1027
        %v1030 = vrot.slane %v748, 2
        %v1031 = vsel %vm987, %v1030, %v1029
        %v1032 = vrot.slane %v749, 1
        %v1033 = vsel %vm990, %v1032, %v1031
        %s1038 = scalar_lea.vmem [#allocation2], 16
        %vm1039 = vcmask 31744
        %1040 = vst.msk [vmem:[%s1038 + $0x1] sm:$0xff] %vm1039, %v991
        %1041 = vst.msk [vmem:[%s1038 + $0x11] sm:$0xff] %vm1039, %v1005
        %1042 = vst.msk [vmem:[%s1038 + $0x21] sm:$0xff] %vm1039, %v1019
        %1043 = vst.msk [vmem:[%s1038 + $0x31] sm:$0xff] %vm1039, %v1033
        %p1044 = scmp.gt.s32.totalorder %s28, 0
        %s1045 = scalar_select %p1044, 1, 0
        %v1046 = vstv %s1045
        %vm1047 = vcmp.eq.s32.totalorder %v1046, 1
        %v1048 = vsel %vm1047, %v830, 0.0
        %v1049 = vsel %vm1047, %v831, 0.0
        %v1050 = vsel %vm1047, %v832, 0.0
        %v1051 = vsel %vm1047, %v833, 0.0
        %v1052 = vsel %vm1047, %v834, 0.0
        %v1053 = vsel %vm1047, %v835, 0.0
        %v1054 = vsel %vm1047, %v836, 0.0
        %v1055 = vsel %vm1047, %v837, 0.0
        %v1064 = vrot.slane %v1049, 7
        %v1065 = vsel %vm972, %v1064, %v1048
        %v1066 = vrot.slane %v1050, 6
        %v1067 = vsel %vm975, %v1066, %v1065
        %v1068 = vrot.slane %v1051, 5
        %v1069 = vsel %vm978, %v1068, %v1067
        %v1070 = vrot.slane %v1052, 4
        %v1071 = vsel %vm981, %v1070, %v1069
        %v1072 = vrot.slane %v1053, 3
        %v1073 = vsel %vm984, %v1072, %v1071
        %v1074 = vrot.slane %v1054, 2
        %v1075 = vsel %vm987, %v1074, %v1073
        %v1076 = vrot.slane %v1055, 1
        %v1077 = vsel %vm990, %v1076, %v1075
        %1079 = vst.msk [vmem:[#allocation2 + $0x1] sm:$0xff] %vm1039, %v1077
        %p1080 = scmp.lt.s32.totalorder %s28, 1
        %s1081 = scalar_select %p1080, 1, 0
        %v1082 = vstv %s1081
        %vm1083 = vcmp.eq.s32.totalorder %v1082, 1
        %v1084 = vsel %vm1083, %v918, 0.0
        %v1085 = vsel %vm1083, %v919, 0.0
        %v1086 = vsel %vm1083, %v920, 0.0
        %v1087 = vsel %vm1083, %v921, 0.0
        %v1088 = vsel %vm1083, %v922, 0.0
        %v1089 = vsel %vm1083, %v923, 0.0
        %v1090 = vsel %vm1083, %v924, 0.0
        %v1091 = vsel %vm1083, %v925, 0.0
        %v1100 = vrot.slane %v1085, 7
        %v1101 = vsel %vm972, %v1100, %v1084
        %v1102 = vrot.slane %v1086, 6
        %v1103 = vsel %vm975, %v1102, %v1101
        %v1104 = vrot.slane %v1087, 5
        %v1105 = vsel %vm978, %v1104, %v1103
        %v1106 = vrot.slane %v1088, 4
        %v1107 = vsel %vm981, %v1106, %v1105
        %v1108 = vrot.slane %v1089, 3
        %v1109 = vsel %vm984, %v1108, %v1107
        %v1110 = vrot.slane %v1090, 2
        %v1111 = vsel %vm987, %v1110, %v1109
        %v1112 = vrot.slane %v1091, 1
        %v1113 = vsel %vm990, %v1112, %v1111
        %s1115 = scalar_lea.vmem [#allocation2], 80
        %1116 = vst.msk [vmem:[%s1115 + $0x1] sm:$0xff] %vm1039, %v1113
        %v1117 = vld [vmem:[#allocation2] sm:$0xff]
        %v1118 = vld [vmem:[#allocation2 + $0x10] sm:$0xff]
        %v1119 = vld [vmem:[#allocation2 + $0x20] sm:$0xff]
        %v1120 = vld [vmem:[#allocation2 + $0x30] sm:$0xff]
        %v1121 = vld [vmem:[#allocation2 + $0x1] sm:$0xff]
        %v1122 = vld [vmem:[#allocation2 + $0x11] sm:$0xff]
        %v1123 = vld [vmem:[#allocation2 + $0x21] sm:$0xff]
        %v1124 = vld [vmem:[#allocation2 + $0x31] sm:$0xff]
        %v1125 = vld [vmem:[#allocation2 + $0x2] sm:$0xff]
        %v1126 = vld [vmem:[#allocation2 + $0x12] sm:$0xff]
        %v1127 = vld [vmem:[#allocation2 + $0x22] sm:$0xff]
        %v1128 = vld [vmem:[#allocation2 + $0x32] sm:$0xff]
        %v1129 = vld [vmem:[%s1038] sm:$0xff]
        %v1130 = vld [vmem:[%s1038 + $0x10] sm:$0xff]
        %v1131 = vld [vmem:[%s1038 + $0x20] sm:$0xff]
        %v1132 = vld [vmem:[%s1038 + $0x30] sm:$0xff]
        %v1133 = vld [vmem:[%s1038 + $0x1] sm:$0xff]
        %v1134 = vld [vmem:[%s1038 + $0x11] sm:$0xff]
        %v1135 = vld [vmem:[%s1038 + $0x21] sm:$0xff]
        %v1136 = vld [vmem:[%s1038 + $0x31] sm:$0xff]
        %v1137 = vld [vmem:[%s1038 + $0x2] sm:$0xff]
        %v1138 = vld [vmem:[%s1038 + $0x12] sm:$0xff]
        %v1139 = vld [vmem:[%s1038 + $0x22] sm:$0xff]
        %v1140 = vld [vmem:[%s1038 + $0x32] sm:$0xff]
        %s1141 = scalar_lea.vmem [#allocation2], 32
        %v1142 = vld [vmem:[%s1141] sm:$0xff]
        %v1143 = vld [vmem:[%s1141 + $0x10] sm:$0xff]
        %v1144 = vld [vmem:[%s1141 + $0x20] sm:$0xff]
        %v1145 = vld [vmem:[%s1141 + $0x30] sm:$0xff]
        %v1146 = vld [vmem:[%s1141 + $0x1] sm:$0xff]
        %v1147 = vld [vmem:[%s1141 + $0x11] sm:$0xff]
        %v1148 = vld [vmem:[%s1141 + $0x21] sm:$0xff]
        %v1149 = vld [vmem:[%s1141 + $0x31] sm:$0xff]
        %v1150 = vld [vmem:[%s1141 + $0x2] sm:$0xff]
        %v1151 = vld [vmem:[%s1141 + $0x12] sm:$0xff]
        %v1152 = vld [vmem:[%s1141 + $0x22] sm:$0xff]
        %v1153 = vld [vmem:[%s1141 + $0x32] sm:$0xff]
        %1158 = vrot.lane.b32.xlu0 %v1121, 4
        %v1159 = vpop.permute.xlu0 %1158
        %1160 = vrot.lane.b32.xlu0 %v1122, 4
        %v1161 = vpop.permute.xlu0 %1160
        %1162 = vrot.lane.b32.xlu0 %v1123, 4
        %v1163 = vpop.permute.xlu0 %1162
        %1164 = vrot.lane.b32.xlu0 %v1124, 4
        %v1165 = vpop.permute.xlu0 %1164
        %1174 = vrot.lane.b32.xlu0 %v1125, 8
        %v1175 = vpop.permute.xlu0 %1174
        %1176 = vrot.lane.b32.xlu0 %v1126, 8
        %v1177 = vpop.permute.xlu0 %1176
        %1178 = vrot.lane.b32.xlu0 %v1127, 8
        %v1179 = vpop.permute.xlu0 %1178
        %1180 = vrot.lane.b32.xlu0 %v1128, 8
        %v1181 = vpop.permute.xlu0 %1180
        %1190 = vrot.lane.b32.xlu0 %v1129, 12
        %v1191 = vpop.permute.xlu0 %1190
        %1192 = vrot.lane.b32.xlu0 %v1130, 12
        %v1193 = vpop.permute.xlu0 %1192
        %1194 = vrot.lane.b32.xlu0 %v1131, 12
        %v1195 = vpop.permute.xlu0 %1194
        %1196 = vrot.lane.b32.xlu0 %v1132, 12
        %v1197 = vpop.permute.xlu0 %1196
        %1206 = vrot.lane.b32.xlu0 %v1133, 16
        %v1207 = vpop.permute.xlu0 %1206
        %1208 = vrot.lane.b32.xlu0 %v1134, 16
        %v1209 = vpop.permute.xlu0 %1208
        %1210 = vrot.lane.b32.xlu0 %v1135, 16
        %v1211 = vpop.permute.xlu0 %1210
        %1212 = vrot.lane.b32.xlu0 %v1136, 16
        %v1213 = vpop.permute.xlu0 %1212
        %1222 = vrot.lane.b32.xlu0 %v1137, 20
        %v1223 = vpop.permute.xlu0 %1222
        %1224 = vrot.lane.b32.xlu0 %v1138, 20
        %v1225 = vpop.permute.xlu0 %1224
        %1226 = vrot.lane.b32.xlu0 %v1139, 20
        %v1227 = vpop.permute.xlu0 %1226
        %1228 = vrot.lane.b32.xlu0 %v1140, 20
        %v1229 = vpop.permute.xlu0 %1228
        %1238 = vrot.lane.b32.xlu0 %v1142, 24
        %v1239 = vpop.permute.xlu0 %1238
        %1240 = vrot.lane.b32.xlu0 %v1143, 24
        %v1241 = vpop.permute.xlu0 %1240
        %1242 = vrot.lane.b32.xlu0 %v1144, 24
        %v1243 = vpop.permute.xlu0 %1242
        %1244 = vrot.lane.b32.xlu0 %v1145, 24
        %v1245 = vpop.permute.xlu0 %1244
        %1254 = vrot.lane.b32.xlu0 %v1146, 28
        %v1255 = vpop.permute.xlu0 %1254
        %1256 = vrot.lane.b32.xlu0 %v1147, 28
        %v1257 = vpop.permute.xlu0 %1256
        %1258 = vrot.lane.b32.xlu0 %v1148, 28
        %v1259 = vpop.permute.xlu0 %1258
        %1260 = vrot.lane.b32.xlu0 %v1149, 28
        %v1261 = vpop.permute.xlu0 %1260
        %1270 = vrot.lane.b32.xlu0 %v1150, 32
        %v1271 = vpop.permute.xlu0 %1270
        %1272 = vrot.lane.b32.xlu0 %v1151, 32
        %v1273 = vpop.permute.xlu0 %1272
        %1274 = vrot.lane.b32.xlu0 %v1152, 32
        %v1275 = vpop.permute.xlu0 %1274
        %1276 = vrot.lane.b32.xlu0 %v1153, 32
        %v1277 = vpop.permute.xlu0 %1276
        %v1282 = vsel %vm1039, %v1117, %v1159
        %v1283 = vsel %vm1039, %v1118, %v1161
        %v1284 = vsel %vm1039, %v1119, %v1163
        %v1285 = vsel %vm1039, %v1120, %v1165
        %vm1286 = vcmask 64512
        %v1287 = vsel %vm1286, %v1282, %v1175
        %v1288 = vsel %vm1286, %v1283, %v1177
        %v1289 = vsel %vm1286, %v1284, %v1179
        %v1290 = vsel %vm1286, %v1285, %v1181
        %vm1291 = vcmask 97280
        %v1292 = vsel %vm1291, %v1287, %v1191
        %v1293 = vsel %vm1291, %v1288, %v1193
        %v1294 = vsel %vm1291, %v1289, %v1195
        %v1295 = vsel %vm1291, %v1290, %v1197
        %vm1296 = vcmask 130048
        %v1297 = vsel %vm1296, %v1292, %v1207
        %v1298 = vsel %vm1296, %v1293, %v1209
        %v1299 = vsel %vm1296, %v1294, %v1211
        %v1300 = vsel %vm1296, %v1295, %v1213
        %vm1301 = vcmask 162816
        %v1302 = vsel %vm1301, %v1297, %v1223
        %v1303 = vsel %vm1301, %v1298, %v1225
        %v1304 = vsel %vm1301, %v1299, %v1227
        %v1305 = vsel %vm1301, %v1300, %v1229
        %vm1306 = vcmask 195584
        %v1307 = vsel %vm1306, %v1302, %v1239
        %v1308 = vsel %vm1306, %v1303, %v1241
        %v1309 = vsel %vm1306, %v1304, %v1243
        %v1310 = vsel %vm1306, %v1305, %v1245
        %vm1311 = vcmask 228352
        %v1312 = vsel %vm1311, %v1307, %v1255
        %v1313 = vsel %vm1311, %v1308, %v1257
        %v1314 = vsel %vm1311, %v1309, %v1259
        %v1315 = vsel %vm1311, %v1310, %v1261
        %vm1316 = vcmask 261120
        %v1317 = vsel %vm1316, %v1312, %v1271
        %v1318 = vsel %vm1316, %v1313, %v1273
        %v1319 = vsel %vm1316, %v1314, %v1275
        %v1320 = vsel %vm1316, %v1315, %v1277
        %v1321 = vld [vmem:[%s3] sm:$0xff]
        %v1322 = vld [vmem:[%s3 + $0x8] sm:$0xff]
        %v1323 = vld [vmem:[%s3 + $0x10] sm:$0xff]
        %v1324 = vld [vmem:[%s3 + $0x18] sm:$0xff]
        %v1325 = vld [vmem:[%s3 + $0x20] sm:$0xf]
        %vm1326 = vcmask 293888
        %v1328 = vsel %vm1326, %v1317, 0
        %v1331 = vsel %vm1326, %v1318, 0
        %v1334 = vsel %vm1326, %v1319, 0
        %v1337 = vsel %vm1326, %v1320, 0
        %vm1339 = vcmask 1043456
        %v1341 = vsel %vm1339, %v1325, 0
        %1343 = vmatpush.msra.mxu0 0.0
        %1344 = vmatpush.msra.mxu0 0.0
        %1345 = vmatpush.msra.mxu0 0.0
        %1346 = vmatpush.msra.mxu0 0.0
        %1347 = vmatpush.msra.mxu0 0.0
        %1348 = vmatpush.msra.mxu0 0.0
        %1349 = vmatpush.msra.mxu0 0.0
        %1350 = vmatpush.msra.mxu0 0.0
        %1351 = vmatpush.msra.mxu0 0.0
        %1352 = vmatpush.msra.mxu0 0.0
        %1353 = vmatpush.msra.mxu0 0.0
        %1354 = vmatpush.msra.mxu0 %v1341
        %1355 = vmatpush.msra.mxu0 %v1324
        %1356 = vmatpush.msra.mxu0 %v1323
        %1357 = vmatpush.msra.mxu0 %v1322
        %1358 = vmatpush.msra.mxu0 %v1321
        %1359 = vmatmul.f32.gmra.mxu0 %v1328
        %v1360 = vpop.f32.mrf.mxu0
        %v1361 = vadd.f32 0.0, %v1360
        %1362 = vmatmul.f32.gmra.mxu0 %v1331
        %v1363 = vpop.f32.mrf.mxu0
        %v1364 = vadd.f32 0.0, %v1363
        %1365 = vmatmul.f32.gmra.mxu0 %v1334
        %v1366 = vpop.f32.mrf.mxu0
        %v1367 = vadd.f32 0.0, %v1366
        %1368 = vmatmul.f32.gmra.mxu0 %v1337
        %v1369 = vpop.f32.mrf.mxu0
        %v1370 = vadd.f32 0.0, %v1369
        %1371 = vdwg.mxu0
        %1372 = vst.msk [vmem:[%s342] sm:$0xff] %vm1286, %v1361
        %1373 = vst.msk [vmem:[%s342 + $0x8] sm:$0xff] %vm1286, %v1364
        %1374 = vst.msk [vmem:[%s342 + $0x10] sm:$0xff] %vm1286, %v1367
        %1375 = vst.msk [vmem:[%s342 + $0x18] sm:$0xff] %vm1286, %v1370
        %v1376 = vsel %vm1286, %v1361, 0.0
        %v1377 = vsel %vm1286, %v1364, 0.0
        %v1378 = vadd.f32 %v1376, %v1377
        %v1379 = vsel %vm1286, %v1367, 0.0
        %v1380 = vadd.f32 %v1378, %v1379
        %v1381 = vsel %vm1286, %v1370, 0.0
        %v1382 = vadd.f32 %v1380, %v1381
        %v1383 = vrot.slane %v1382, 4
        %v1384 = vadd.f32 %v1382, %v1383
        %v1385 = vrot.slane %v1384, 2
        %v1386 = vadd.f32 %v1384, %v1385
        %v1387 = vrot.slane %v1386, 1
        %v1388 = vadd.f32 %v1386, %v1387
        %v1389 = vmul.f32 %v1388, 0.03125
        %v1390 = vsub.f32 %v1361, %v1389
        %v1391 = vsub.f32 %v1364, %v1389
        %v1392 = vsub.f32 %v1367, %v1389
        %v1393 = vsub.f32 %v1370, %v1389
        %v1394 = vmul.f32 %v1390, %v1390
        %v1395 = vmul.f32 %v1391, %v1391
        %v1396 = vmul.f32 %v1392, %v1392
        %v1397 = vmul.f32 %v1393, %v1393
        %v1398 = vsel %vm1286, %v1394, 0.0
        %v1399 = vsel %vm1286, %v1395, 0.0
        %v1400 = vadd.f32 %v1398, %v1399
        %v1401 = vsel %vm1286, %v1396, 0.0
        %v1402 = vadd.f32 %v1400, %v1401
        %v1403 = vsel %vm1286, %v1397, 0.0
        %v1404 = vadd.f32 %v1402, %v1403
        %v1405 = vrot.slane %v1404, 4
        %v1406 = vadd.f32 %v1404, %v1405
        %v1407 = vrot.slane %v1406, 2
        %v1408 = vadd.f32 %v1406, %v1407
        %v1409 = vrot.slane %v1408, 1
        %v1410 = vadd.f32 %v1408, %v1409
        %vm1411 = vcmask 57344
        %1412 = vst.msk [vmem:[%s349] sm:$0x1] %vm1411, %v1388
        %1413 = vst.msk [vmem:[%s349 + $0x1] sm:$0x1] %vm1411, %v1410
        %s1414 = sand.u32 %s166, 1
        %s1415 = scalar_lea.sflag [#allocation4], %s1414
        %s1416 = sand.u32 %s166, 1
        %s1417 = smul.addr %s1416, 32
        %s1418 = scalar_lea.vmem [#allocation3], %s1417
        %s1419 = sand.u32 %s196, 1
        %s1420 = scalar_lea.sflag [#allocation6], %s1419
        %s1421 = sand.u32 %s196, 1
        %s1422 = smul.addr %s1421, 2
        %s1423 = scalar_lea.vmem [#allocation5], %s1422
        // Predicated region
        $region37: #{tpu_custom_call.1} parent=35 // pred_check
          %p1424 = pneg %p176
        $region38: #{tpu_custom_call.1} parent=35 // pred_check_branch
          %1426 = sbr.rel (%p1424) target = $region40
        $region39: #{tpu_custom_call.1} parent=35 // pred_region
          %s1427 = smul.u32 4, %s28
          %1429 = vsyncadd %s1415, 0
          %s1430 = smul.addr %s27, 8
          %s1431 = sadd.s32 %s1427, %s1430
          %s1432 = smul.addr %s1431, 8
          %s1433 = scalar_lea.hbm %s4, %s1432
          %s1434 = sshll.u32 %s1418, 4
          %s1435 = int_to_ptr.vmem [resolvable:$true] %s1434
          %s1436 = sshll.u32 %s1433, 4
          %s1437 = int_to_ptr.hbm [resolvable:$true] %s1436
          %1442 = dma.vmem_to_hbm [thread:$0]  %s1435, 512, %s1437, %s1415, 128, 128, 8
        $region40: #{tpu_custom_call.1} parent=35 // pred_fallthru
          _
        // Predicated region
        $region41: #{tpu_custom_call.1} parent=35 // pred_check
          %p1443 = pneg %p206
        $region42: #{tpu_custom_call.1} parent=35 // pred_check_branch
          %1445 = sbr.rel (%p1443) target = $region44
        $region43: #{tpu_custom_call.1} parent=35 // pred_region
          %s1446 = smul.u32 %s27, 2
          %s1447 = sadd.s32 %s1446, %s28
          %1449 = vsyncadd %s1420, 0
          %s1450 = smul.addr %s1447, 2
          %s1451 = scalar_lea.hbm %s5, %s1450
          %s1453 = sshll.u32 %s1423, 4
          %s1454 = int_to_ptr.vmem [resolvable:$true] %s1453
          %s1455 = sshll.u32 %s1451, 4
          %s1456 = int_to_ptr.hbm [resolvable:$true] %s1455
          %1458 = dma.vmem_to_hbm [thread:$0]  %s1454, 32, %s1456, %s1420
        $region44: #{tpu_custom_call.1} parent=35 // pred_fallthru
          _
      $region36: #{tpu_custom_call.1} parent=5 // pred_fallthru
        _
      %p1459 = scmp.le.s32.totalorder 2, %s18
      // Predicated region
      $region45: #{tpu_custom_call.1} parent=5 // pred_check
        %p1460 = pneg %p1459
      $region46: #{tpu_custom_call.1} parent=5 // pred_check_branch
        %1462 = sbr.rel (%p1460) target = $region48
      $region47: #{tpu_custom_call.1} parent=5 // pred_region
        %s1463 = ssub.s32 %s18, 2
        // Predicated region
        $region49: #{tpu_custom_call.1} parent=47 // pred_check
          %p1464 = pneg %p182
        $region50: #{tpu_custom_call.1} parent=47 // pred_check_branch
          %1466 = sbr.rel (%p1464) target = $region52
        $region51: #{tpu_custom_call.1} parent=47 // pred_region
          %s1467 = sand.u32 %s167, 1
          %s1468 = scalar_lea.sflag [#allocation4], %s1467
          %s1469 = sand.u32 %s167, 1
          %s1470 = smul.addr %s1469, 32
          %s1471 = scalar_lea.vmem [#allocation3], %s1470
          %1473 = dma.done %s1468, 512
        $region52: #{tpu_custom_call.1} parent=47 // pred_fallthru
          _
        // Predicated region
        $region53: #{tpu_custom_call.1} parent=47 // pred_check
          %p1474 = pneg %p212
        $region54: #{tpu_custom_call.1} parent=47 // pred_check_branch
          %1476 = sbr.rel (%p1474) target = $region56
        $region55: #{tpu_custom_call.1} parent=47 // pred_region
          %s1477 = sand.u32 %s197, 1
          %s1478 = scalar_lea.sflag [#allocation6], %s1477
          %s1479 = sand.u32 %s197, 1
          %s1480 = smul.addr %s1479, 2
          %s1481 = scalar_lea.vmem [#allocation5], %s1480
          %1483 = dma.done %s1478, 32
        $region56: #{tpu_custom_call.1} parent=47 // pred_fallthru
          _
      $region48: #{tpu_custom_call.1} parent=5 // pred_fallthru
        _
    $region6: #{tpu_custom_call.1} parent=1 // loop_footer
      %s22 = sadd.s32 1, %s18
    $region7: #{tpu_custom_call.1} parent=1 // loop_footer_branch
      %17 = sbr.rel target = $region3
    $region8: #{tpu_custom_call.1} parent=1 // loop_exit
      _
    %1484 = vsyncpa [#allocation4], 1
    %s1485 = scalar_lea.sflag [#allocation4], 1
    %1486 = vsyncpa %s1485, 1
    %1487 = vsyncpa [#allocation6], 1
    %s1488 = scalar_lea.sflag [#allocation6], 1
    %1489 = vsyncpa %s1488, 1

</llo_original>
